<compile_context>
chip_gen: v7x
topology: tpu7x:2x2x1
jax: 0.10.0
libtpu: 0.0.40
codegen_flags: <defaults>
</compile_context>

<pallas_src>
import functools

import jax
import jax.numpy as jnp
from jax.experimental import pallas as pl
from jax.experimental.pallas import tpu as pltpu


_LANE = 128
_NEG_SLOPE = 0.2


def _make_fcnet_kernel(num_hidden_layers: int, compute_dtype, negative_slope: float = _NEG_SLOPE):
    """Kernel computing the full FCNet forward for one row tile."""

    def kernel(x_ref, *refs):
        # refs = [w1, b1, w2, b2, ..., w_rgb, b_rgb, out_ref]
        out_ref = refs[-1]
        params = refs[:-1]

        # Activations kept in f32 between layers; cast to compute_dtype (bf16) only when
        # feeding the MXU. Accumulation is always f32 (preferred_element_type).
        h = x_ref[...].astype(jnp.float32)

        # hidden stack: Linear -> LeakyReLU(0.2)
        for l in range(num_hidden_layers):
            w = params[2 * l][...]
            b = params[2 * l + 1][...].astype(jnp.float32)
            h = jnp.dot(h.astype(compute_dtype), w,
                        preferred_element_type=jnp.float32) + b
            h = jnp.where(h >= 0, h, negative_slope * h)

        # to_rgb: Linear -> Tanh   (rgb weights/bias are lane-padded with zeros)
        w_rgb = params[-2][...]
        b_rgb = params[-1][...].astype(jnp.float32)
        y = jnp.dot(h.astype(compute_dtype), w_rgb,
                    preferred_element_type=jnp.float32) + b_rgb
        out_ref[...] = jnp.tanh(y).astype(out_ref.dtype)

    return kernel


def fcnet_forward(x, params, rgb_dim, *, tile_m=512, compute_dtype=jnp.bfloat16):
    """x: (b, num_points, input_dim).  params: flat list [w1,b1,...,w_rgb,b_rgb] in f32,
    weights stored as (in_features, out_features)."""
    b, n, d_in = x.shape
    m = b * n
    orig_dtype = x.dtype

    # bf16 (and narrower) needs a sublane tile multiple of 16.
    if jnp.dtype(compute_dtype).itemsize < 4:
        assert tile_m % 16 == 0, "tile_m must be a multiple of 16 for sub-32-bit compute dtypes"
    else:
        assert tile_m % 8 == 0, "tile_m must be a multiple of 8"

    num_hidden_layers = (len(params) - 2) // 2

    # ---- cast / pad parameters -------------------------------------------------------
    rgb_pad = pl.cdiv(rgb_dim, _LANE) * _LANE  # lane-dense output width (e.g. 3 -> 128)

    cast_params = []
    layer_dims = []
    cur_in = d_in
    for l in range(num_hidden_layers):
        w, bias = params[2 * l], params[2 * l + 1]
        cast_params.append(w.astype(compute_dtype))
        cast_params.append(bias.astype(jnp.float32))
        layer_dims.append((cur_in, w.shape[1]))
        cur_in = w.shape[1]

    w_rgb, b_rgb = params[-2], params[-1]
    w_rgb_p = jnp.zeros((cur_in, rgb_pad), compute_dtype).at[:, :rgb_dim].set(
        w_rgb.astype(compute_dtype))
    b_rgb_p = jnp.zeros((1, rgb_pad), jnp.float32).at[:, :rgb_dim].set(
        b_rgb.astype(jnp.float32))
    cast_params += [w_rgb_p, b_rgb_p]
    layer_dims.append((cur_in, rgb_pad))

    # ---- pad rows to a multiple of tile_m (zero rows are harmless & sliced off) -------
    n_tiles = pl.cdiv(m, tile_m)
    m_pad = n_tiles * tile_m
    x2d = x.reshape(m, d_in).astype(compute_dtype)
    if m_pad != m:
        x2d = jnp.pad(x2d, ((0, m_pad - m), (0, 0)))

    grid = (n_tiles,)

    # ---- BlockSpecs --------------------------------------------------------------------
    in_specs = [pl.BlockSpec((tile_m, d_in), lambda i: (i, 0))]
    for p in cast_params:
        # grid-invariant parameter: single-buffered, whole array as one block.
        # (bind ndim via default arg to avoid the late-binding-closure bug)
        in_specs.append(
            pl.BlockSpec(p.shape, lambda i, nd=p.ndim: (0,) * nd,
                         pipeline_mode=pl.Buffered(1)))
    out_specs = pl.BlockSpec((tile_m, rgb_pad), lambda i: (i, 0))

    # ---- cost estimate -----------------------------------------------------------------
    flops = 2 * m_pad * sum(a * o for a, o in layer_dims)
    bytes_accessed = (x2d.size * x2d.dtype.itemsize
                      + sum(int(p.size) * p.dtype.itemsize for p in cast_params)
                      + m_pad * rgb_pad * jnp.dtype(orig_dtype).itemsize)
    transcendentals = m_pad * rgb_pad  # tanh
    cost = pl.CostEstimate(flops=int(flops),
                           transcendentals=int(transcendentals),
                           bytes_accessed=int(bytes_accessed))

    # ---- VMEM budget: 2x x-tile + 2x out-tile + single-buffered params + f32 act scratch
    c_item = jnp.dtype(compute_dtype).itemsize
    o_item = jnp.dtype(orig_dtype).itemsize
    max_width = max([d_in] + [o for _, o in layer_dims])
    vmem_needed = (2 * tile_m * d_in * c_item
                   + 2 * tile_m * rgb_pad * o_item
                   + sum(int(p.size) * p.dtype.itemsize for p in cast_params)
                   + 4 * tile_m * max_width * 4)
    vmem_limit = int(min(max(int(vmem_needed * 1.5) + (4 << 20), 16 << 20), 48 << 20))

    kernel = _make_fcnet_kernel(num_hidden_layers, compute_dtype)

    out2d = pl.pallas_call(
        kernel,
        out_shape=jax.ShapeDtypeStruct((m_pad, rgb_pad), orig_dtype),
        grid_spec=pltpu.PrefetchScalarGridSpec(
            num_scalar_prefetch=0,
            grid=grid,
            in_specs=in_specs,
            out_specs=out_specs,
        ),
        compiler_params=pltpu.CompilerParams(
            dimension_semantics=("parallel",),
            vmem_limit_bytes=vmem_limit,
        ),
        cost_estimate=cost,
    )(x2d, *cast_params)

    return out2d[:m, :rgb_dim].reshape(b, n, rgb_dim)


def init_fcnet_params(key, input_dim, hidden_dim, hidden_layers, rgb_dim):
    """Deterministic kaiming-leaky-style init, weights stored as (in, out), f32."""
    params = []
    d_in = input_dim
    negative_slope = _NEG_SLOPE
    for _ in range(hidden_layers):
        key, wk = jax.random.split(key)
        gain = jnp.sqrt(2.0 / (1.0 + negative_slope ** 2))
        std = gain / jnp.sqrt(float(d_in))  # fan_in = d_in
        w = jax.random.normal(wk, (d_in, hidden_dim), jnp.float32) * std
        b = jnp.zeros((1, hidden_dim), jnp.float32)
        params += [w, b]
        d_in = hidden_dim
    # to_rgb Linear (PyTorch-default-style uniform init, done deterministically here)
    key, wk, bk = jax.random.split(key, 3)
    bound = 1.0 / jnp.sqrt(float(d_in))
    w_rgb = jax.random.uniform(wk, (d_in, rgb_dim), jnp.float32, -bound, bound)
    b_rgb = jax.random.uniform(bk, (1, rgb_dim), jnp.float32, -bound, bound)
    params += [w_rgb, b_rgb]
    return params


def fcnet_reference(x, params):
    """Pure-JAX f32 reference of the same forward."""
    num_hidden_layers = (len(params) - 2) // 2
    h = x
    for l in range(num_hidden_layers):
        w, b = params[2 * l], params[2 * l + 1]
        h = jnp.dot(h, w) + b
        h = jnp.where(h >= 0, h, _NEG_SLOPE * h)
    y = jnp.dot(h, params[-2]) + params[-1]
    return jnp.tanh(y)


if __name__ == "__main__":
    # Small shapes consistent with the module: points xyz -> input_dim = 3.
    batch = 2
    num_points = 8
    input_dim = 3
    hidden_dim = 32
    hidden_layers = 2
    rgb_dim = 3

    key = jax.random.PRNGKey(0)
    key, xk = jax.random.split(key)
    x = jax.random.normal(xk, (batch, num_points, input_dim), jnp.float32)

    params = init_fcnet_params(key, input_dim, hidden_dim, hidden_layers, rgb_dim)
    ref = fcnet_reference(x, params)

    # Default fast path: bf16 MXU feed, f32 accumulation.
    out_bf16 = fcnet_forward(x, params, rgb_dim)  # tile_m=512, compute_dtype=bf16
    out_bf16 = jax.block_until_ready(out_bf16)
    assert out_bf16.shape == (batch, num_points, rgb_dim)
    assert jnp.allclose(out_bf16, ref, atol=3e-2, rtol=3e-2), "bf16 path mismatch"

    # Full-precision path for a tight correctness check.
    out_f32 = fcnet_forward(x, params, rgb_dim, compute_dtype=jnp.float32)
    out_f32 = jax.block_until_ready(out_f32)
    assert jnp.allclose(out_f32, ref, atol=1e-5, rtol=1e-5), "f32 path mismatch"

    print("KERNEL_OK")
</pallas_src>

<mosaic_0001>
module attributes {stable_mosaic.version = 11 : i64} {
  func.func @kernel(%arg0: i32, %arg1: memref<512x3xbf16, #tpu.memory_space<vmem>>, %arg2: memref<3x32xbf16, #tpu.memory_space<vmem>>, %arg3: memref<1x32xf32, #tpu.memory_space<vmem>>, %arg4: memref<32x32xbf16, #tpu.memory_space<vmem>>, %arg5: memref<1x32xf32, #tpu.memory_space<vmem>>, %arg6: memref<32x128xbf16, #tpu.memory_space<vmem>>, %arg7: memref<1x128xf32, #tpu.memory_space<vmem>>, %arg8: memref<512x128xf32, #tpu.memory_space<vmem>>) attributes {dimension_semantics = [#tpu.dimension_semantics<parallel>], iteration_bounds = array<i64: 1>, scalar_prefetch = 0 : i64, scratch_operands = 0 : i64, tpu.core_type = #tpu.core_type<tc>, window_params = [{transform_indices = @transform_0, window_bounds = array<i64: 512, 3>}, {pipeline_mode = #tpu.pipeline_mode<synchronous>, transform_indices = @transform_1, window_bounds = array<i64: 3, 32>}, {pipeline_mode = #tpu.pipeline_mode<synchronous>, transform_indices = @transform_2, window_bounds = array<i64: 1, 32>}, {pipeline_mode = #tpu.pipeline_mode<synchronous>, transform_indices = @transform_3, window_bounds = array<i64: 32, 32>}, {pipeline_mode = #tpu.pipeline_mode<synchronous>, transform_indices = @transform_4, window_bounds = array<i64: 1, 32>}, {pipeline_mode = #tpu.pipeline_mode<synchronous>, transform_indices = @transform_5, window_bounds = array<i64: 32, 128>}, {pipeline_mode = #tpu.pipeline_mode<synchronous>, transform_indices = @transform_6, window_bounds = array<i64: 1, 128>}, {transform_indices = @transform_7, window_bounds = array<i64: 512, 128>}]} {
    %c0 = arith.constant 0 : index
    %c0_0 = arith.constant 0 : index
    %0 = vector.load %arg1[%c0, %c0_0] : memref<512x3xbf16, #tpu.memory_space<vmem>>, vector<512x3xbf16>
    %1 = arith.extf %0 : vector<512x3xbf16> to vector<512x3xf32>
    %c0_1 = arith.constant 0 : index
    %c0_2 = arith.constant 0 : index
    %2 = vector.load %arg2[%c0_1, %c0_2] : memref<3x32xbf16, #tpu.memory_space<vmem>>, vector<3x32xbf16>
    %c0_3 = arith.constant 0 : index
    %c0_4 = arith.constant 0 : index
    %3 = vector.load %arg3[%c0_3, %c0_4] : memref<1x32xf32, #tpu.memory_space<vmem>>, vector<1x32xf32>
    %4 = arith.truncf %1 : vector<512x3xf32> to vector<512x3xbf16>
    %cst = arith.constant dense<0.000000e+00> : vector<512x32xf32>
    %5 = tpu.matmul %4, %2, %cst {dimension_numbers = #tpu.dot_dimension_numbers<[1], [0], [0], [1], [0, 0, 1, 1], [], []>} : vector<512x3xbf16>, vector<3x32xbf16>, vector<512x32xf32> -> vector<512x32xf32>
    %6 = vector.broadcast %3 : vector<1x32xf32> to vector<512x32xf32>
    %7 = arith.addf %5, %6 : vector<512x32xf32>
    %cst_5 = arith.constant 0.000000e+00 : f32
    %8 = vector.broadcast %cst_5 : f32 to vector<512x32xf32>
    %9 = arith.cmpf oge, %7, %8 : vector<512x32xf32>
    %cst_6 = arith.constant 2.000000e-01 : f32
    %10 = vector.broadcast %cst_6 : f32 to vector<512x32xf32>
    %11 = arith.mulf %10, %7 : vector<512x32xf32>
    %12 = arith.select %9, %7, %11 : vector<512x32xi1>, vector<512x32xf32>
    %c0_7 = arith.constant 0 : index
    %c0_8 = arith.constant 0 : index
    %13 = vector.load %arg4[%c0_7, %c0_8] : memref<32x32xbf16, #tpu.memory_space<vmem>>, vector<32x32xbf16>
    %c0_9 = arith.constant 0 : index
    %c0_10 = arith.constant 0 : index
    %14 = vector.load %arg5[%c0_9, %c0_10] : memref<1x32xf32, #tpu.memory_space<vmem>>, vector<1x32xf32>
    %15 = arith.truncf %12 : vector<512x32xf32> to vector<512x32xbf16>
    %cst_11 = arith.constant dense<0.000000e+00> : vector<512x32xf32>
    %16 = tpu.matmul %15, %13, %cst_11 {dimension_numbers = #tpu.dot_dimension_numbers<[1], [0], [0], [1], [0, 0, 1, 1], [], []>} : vector<512x32xbf16>, vector<32x32xbf16>, vector<512x32xf32> -> vector<512x32xf32>
    %17 = vector.broadcast %14 : vector<1x32xf32> to vector<512x32xf32>
    %18 = arith.addf %16, %17 : vector<512x32xf32>
    %cst_12 = arith.constant 0.000000e+00 : f32
    %19 = vector.broadcast %cst_12 : f32 to vector<512x32xf32>
    %20 = arith.cmpf oge, %18, %19 : vector<512x32xf32>
    %cst_13 = arith.constant 2.000000e-01 : f32
    %21 = vector.broadcast %cst_13 : f32 to vector<512x32xf32>
    %22 = arith.mulf %21, %18 : vector<512x32xf32>
    %23 = arith.select %20, %18, %22 : vector<512x32xi1>, vector<512x32xf32>
    %c0_14 = arith.constant 0 : index
    %c0_15 = arith.constant 0 : index
    %24 = vector.load %arg6[%c0_14, %c0_15] : memref<32x128xbf16, #tpu.memory_space<vmem>>, vector<32x128xbf16>
    %c0_16 = arith.constant 0 : index
    %c0_17 = arith.constant 0 : index
    %25 = vector.load %arg7[%c0_16, %c0_17] : memref<1x128xf32, #tpu.memory_space<vmem>>, vector<1x128xf32>
    %26 = arith.truncf %23 : vector<512x32xf32> to vector<512x32xbf16>
    %cst_18 = arith.constant dense<0.000000e+00> : vector<512x128xf32>
    %27 = tpu.matmul %26, %24, %cst_18 {dimension_numbers = #tpu.dot_dimension_numbers<[1], [0], [0], [1], [0, 0, 1, 1], [], []>} : vector<512x32xbf16>, vector<32x128xbf16>, vector<512x128xf32> -> vector<512x128xf32>
    %28 = vector.broadcast %25 : vector<1x128xf32> to vector<512x128xf32>
    %29 = arith.addf %27, %28 : vector<512x128xf32>
    %30 = math.tanh %29 : vector<512x128xf32>
    %c0_19 = arith.constant 0 : index
    %c0_20 = arith.constant 0 : index
    %31 = vector.load %arg8[%c0_19, %c0_20] : memref<512x128xf32, #tpu.memory_space<vmem>>, vector<512x128xf32>
    tpu.vector_store %arg8[%c0_19, %c0_20], %30 {strides = array<i32>} : memref<512x128xf32, #tpu.memory_space<vmem>>, vector<512x128xf32>,
    return
  }
  func.func @transform_0(%arg0: i32) -> (i32, i32) {
    %c0_i32 = arith.constant 0 : i32
    %c0_i32_0 = arith.constant 0 : i32
    return %arg0, %c0_i32 : i32, i32
  }
  func.func @transform_1(%arg0: i32) -> (i32, i32) {
    %c0_i32 = arith.constant 0 : i32
    %c0_i32_0 = arith.constant 0 : i32
    %c0_i32_1 = arith.constant 0 : i32
    return %c0_i32, %c0_i32_0 : i32, i32
  }
  func.func @transform_2(%arg0: i32) -> (i32, i32) {
    %c0_i32 = arith.constant 0 : i32
    %c0_i32_0 = arith.constant 0 : i32
    %c0_i32_1 = arith.constant 0 : i32
    return %c0_i32, %c0_i32_0 : i32, i32
  }
  func.func @transform_3(%arg0: i32) -> (i32, i32) {
    %c0_i32 = arith.constant 0 : i32
    %c0_i32_0 = arith.constant 0 : i32
    %c0_i32_1 = arith.constant 0 : i32
    return %c0_i32, %c0_i32_0 : i32, i32
  }
  func.func @transform_4(%arg0: i32) -> (i32, i32) {
    %c0_i32 = arith.constant 0 : i32
    %c0_i32_0 = arith.constant 0 : i32
    %c0_i32_1 = arith.constant 0 : i32
    return %c0_i32, %c0_i32_0 : i32, i32
  }
  func.func @transform_5(%arg0: i32) -> (i32, i32) {
    %c0_i32 = arith.constant 0 : i32
    %c0_i32_0 = arith.constant 0 : i32
    %c0_i32_1 = arith.constant 0 : i32
    return %c0_i32, %c0_i32_0 : i32, i32
  }
  func.func @transform_6(%arg0: i32) -> (i32, i32) {
    %c0_i32 = arith.constant 0 : i32
    %c0_i32_0 = arith.constant 0 : i32
    %c0_i32_1 = arith.constant 0 : i32
    return %c0_i32, %c0_i32_0 : i32, i32
  }
  func.func @transform_7(%arg0: i32) -> (i32, i32) {
    %c0_i32 = arith.constant 0 : i32
    %c0_i32_0 = arith.constant 0 : i32
    return %arg0, %c0_i32 : i32, i32
  }
}

</mosaic_0001>

<llo_original>
// kernel: tpu_custom_call.1
$region0: #{tpu_custom_call.1}
  #allocation0 [shape = 'u32[]', space=smem, size = 0x4, offset = 0x4, fixed_abs, tag = 'smem constant byte address 0x4 - core index']
  #allocation1 [shape = 'u32[144,128]{1,0:T(1,128)}', space=vmem, size = 0x12000, scoped, tag = 'internal scratch']
  %s0 = inlined_call_operand.vmem [shape: bf16[512,3], index: 0, kind: input, shape index: {}]
  %s1 = inlined_call_operand.vmem [shape: bf16[3,32], index: 1, kind: input, shape index: {}]
  %s2 = inlined_call_operand.vmem [shape: f32[1,32], index: 2, kind: input, shape index: {}]
  %s3 = inlined_call_operand.vmem [shape: bf16[32,32], index: 3, kind: input, shape index: {}]
  %s4 = inlined_call_operand.vmem [shape: f32[1,32], index: 4, kind: input, shape index: {}]
  %s5 = inlined_call_operand.vmem [shape: bf16[32,128], index: 5, kind: input, shape index: {}]
  %s6 = inlined_call_operand.vmem [shape: f32[1,128], index: 6, kind: input, shape index: {}]
  %s7 = inlined_call_operand.hbm [shape: f32[512,128], index: 7, kind: output, shape index: {}]
  %s8 = sld [smem:[#allocation0]]
  $region38: #{tpu_custom_call.1} parent=0
    _
  %s10 = ssub.s32 1, %s8
  %s11 = scalar_select 0, %s10, %s8
  $region1: #{tpu_custom_call.1} parent=0
    #allocation2 [shape = 'u8[262144]{0}', space=vmem, size = 0x40000, scoped, tag = 'output window, operand 0, single buffered']
    #allocation3 [shape = 's32[1]{0}', space=sflag, size = 0x4, scoped, tag = 'scoped memory for tpu_custom_call.1']
    %12 = vsyncpa [#allocation3], 0
    // Predicated region
    $region2: #{tpu_custom_call.1} parent=1 // pred_check
      _
    $region3: #{tpu_custom_call.1} parent=1 // pred_check_branch
      %14 = sbr.rel (0) target = $region5
    $region4: #{tpu_custom_call.1} parent=1 // pred_region
      _
    $region5: #{tpu_custom_call.1} parent=1 // pred_fallthru
      _
    // Predicated region
    $region6: #{tpu_custom_call.1} parent=1 // pred_check
      _
    $region7: #{tpu_custom_call.1} parent=1 // pred_check_branch
      %16 = sbr.rel (0) target = $region9
    $region8: #{tpu_custom_call.1} parent=1 // pred_region
      _
    $region9: #{tpu_custom_call.1} parent=1 // pred_fallthru
      _
    // Predicated region
    $region10: #{tpu_custom_call.1} parent=1 // pred_check
      _
    $region11: #{tpu_custom_call.1} parent=1 // pred_check_branch
      %18 = sbr.rel (0) target = $region13
    $region12: #{tpu_custom_call.1} parent=1 // pred_region
      _
    $region13: #{tpu_custom_call.1} parent=1 // pred_fallthru
      _
    // Predicated region
    $region14: #{tpu_custom_call.1} parent=1 // pred_check
      _
    $region15: #{tpu_custom_call.1} parent=1 // pred_check_branch
      %20 = sbr.rel (0) target = $region17
    $region16: #{tpu_custom_call.1} parent=1 // pred_region
      _
    $region17: #{tpu_custom_call.1} parent=1 // pred_fallthru
      _
    // Predicated region
    $region18: #{tpu_custom_call.1} parent=1 // pred_check
      _
    $region19: #{tpu_custom_call.1} parent=1 // pred_check_branch
      %22 = sbr.rel (0) target = $region21
    $region20: #{tpu_custom_call.1} parent=1 // pred_region
      _
    $region21: #{tpu_custom_call.1} parent=1 // pred_fallthru
      _
    // Predicated region
    $region22: #{tpu_custom_call.1} parent=1 // pred_check
      _
    $region23: #{tpu_custom_call.1} parent=1 // pred_check_branch
      %24 = sbr.rel (0) target = $region25
    $region24: #{tpu_custom_call.1} parent=1 // pred_region
      _
    $region25: #{tpu_custom_call.1} parent=1 // pred_fallthru
      _
    // Predicated region
    $region26: #{tpu_custom_call.1} parent=1 // pred_check
      _
    $region27: #{tpu_custom_call.1} parent=1 // pred_check_branch
      %26 = sbr.rel (0) target = $region29
    $region28: #{tpu_custom_call.1} parent=1 // pred_region
      _
    $region29: #{tpu_custom_call.1} parent=1 // pred_fallthru
      _
    %v28 = vld [vmem:[%s0] sm:$0xf]
    %v29 = vld [vmem:[%s0 + $0x4] sm:$0xf]
    %v30 = vld [vmem:[%s0 + $0x8] sm:$0xf]
    %v31 = vld [vmem:[%s0 + $0xc] sm:$0xf]
    %v32 = vld [vmem:[%s0 + $0x10] sm:$0xf]
    %v33 = vld [vmem:[%s0 + $0x14] sm:$0xf]
    %v34 = vld [vmem:[%s0 + $0x18] sm:$0xf]
    %v35 = vld [vmem:[%s0 + $0x1c] sm:$0xf]
    %v36 = vld [vmem:[%s0 + $0x20] sm:$0xf]
    %v37 = vld [vmem:[%s0 + $0x24] sm:$0xf]
    %v38 = vld [vmem:[%s0 + $0x28] sm:$0xf]
    %v39 = vld [vmem:[%s0 + $0x2c] sm:$0xf]
    %v40 = vld [vmem:[%s0 + $0x30] sm:$0xf]
    %v41 = vld [vmem:[%s0 + $0x34] sm:$0xf]
    %v42 = vld [vmem:[%s0 + $0x38] sm:$0xf]
    %v43 = vld [vmem:[%s0 + $0x3c] sm:$0xf]
    %v44 = vld [vmem:[%s0 + $0x40] sm:$0xf]
    %v45 = vld [vmem:[%s0 + $0x44] sm:$0xf]
    %v46 = vld [vmem:[%s0 + $0x48] sm:$0xf]
    %v47 = vld [vmem:[%s0 + $0x4c] sm:$0xf]
    %v48 = vld [vmem:[%s0 + $0x50] sm:$0xf]
    %v49 = vld [vmem:[%s0 + $0x54] sm:$0xf]
    %v50 = vld [vmem:[%s0 + $0x58] sm:$0xf]
    %v51 = vld [vmem:[%s0 + $0x5c] sm:$0xf]
    %v52 = vld [vmem:[%s0 + $0x60] sm:$0xf]
    %v53 = vld [vmem:[%s0 + $0x64] sm:$0xf]
    %v54 = vld [vmem:[%s0 + $0x68] sm:$0xf]
    %v55 = vld [vmem:[%s0 + $0x6c] sm:$0xf]
    %v56 = vld [vmem:[%s0 + $0x70] sm:$0xf]
    %v57 = vld [vmem:[%s0 + $0x74] sm:$0xf]
    %v58 = vld [vmem:[%s0 + $0x78] sm:$0xf]
    %v59 = vld [vmem:[%s0 + $0x7c] sm:$0xf]
    %v60 = vld [vmem:[%s0 + $0x80] sm:$0xf]
    %v61 = vld [vmem:[%s0 + $0x84] sm:$0xf]
    %v62 = vld [vmem:[%s0 + $0x88] sm:$0xf]
    %v63 = vld [vmem:[%s0 + $0x8c] sm:$0xf]
    %v64 = vld [vmem:[%s0 + $0x90] sm:$0xf]
    %v65 = vld [vmem:[%s0 + $0x94] sm:$0xf]
    %v66 = vld [vmem:[%s0 + $0x98] sm:$0xf]
    %v67 = vld [vmem:[%s0 + $0x9c] sm:$0xf]
    %v68 = vld [vmem:[%s0 + $0xa0] sm:$0xf]
    %v69 = vld [vmem:[%s0 + $0xa4] sm:$0xf]
    %v70 = vld [vmem:[%s0 + $0xa8] sm:$0xf]
    %v71 = vld [vmem:[%s0 + $0xac] sm:$0xf]
    %v72 = vld [vmem:[%s0 + $0xb0] sm:$0xf]
    %v73 = vld [vmem:[%s0 + $0xb4] sm:$0xf]
    %v74 = vld [vmem:[%s0 + $0xb8] sm:$0xf]
    %v75 = vld [vmem:[%s0 + $0xbc] sm:$0xf]
    %v76 = vld [vmem:[%s0 + $0xc0] sm:$0xf]
    %v77 = vld [vmem:[%s0 + $0xc4] sm:$0xf]
    %v78 = vld [vmem:[%s0 + $0xc8] sm:$0xf]
    %v79 = vld [vmem:[%s0 + $0xcc] sm:$0xf]
    %v80 = vld [vmem:[%s0 + $0xd0] sm:$0xf]
    %v81 = vld [vmem:[%s0 + $0xd4] sm:$0xf]
    %v82 = vld [vmem:[%s0 + $0xd8] sm:$0xf]
    %v83 = vld [vmem:[%s0 + $0xdc] sm:$0xf]
    %v84 = vld [vmem:[%s0 + $0xe0] sm:$0xf]
    %v85 = vld [vmem:[%s0 + $0xe4] sm:$0xf]
    %v86 = vld [vmem:[%s0 + $0xe8] sm:$0xf]
    %v87 = vld [vmem:[%s0 + $0xec] sm:$0xf]
    %v88 = vld [vmem:[%s0 + $0xf0] sm:$0xf]
    %v89 = vld [vmem:[%s0 + $0xf4] sm:$0xf]
    %v90 = vld [vmem:[%s0 + $0xf8] sm:$0xf]
    %v91 = vld [vmem:[%s0 + $0xfc] sm:$0xf]
    %v92 = vld [vmem:[%s1] sm:$0x3]
    %v93 = vld [vmem:[%s2] sm:$0x1]
    %v95 = vlaneseq
    %v96 = vshrl.u32 %v95, 7
    %v97 = vsub.s32 0, %v96
    %v98 = vrot.slane %v93, %v97
    %v164 = vunpack.c.l.b16 %v28
    %v165 = vunpack.c.l.b16 %v29
    %v166 = vunpack.c.l.b16 %v30
    %v167 = vunpack.c.l.b16 %v31
    %v168 = vunpack.c.l.b16 %v32
    %v169 = vunpack.c.l.b16 %v33
    %v170 = vunpack.c.l.b16 %v34
    %v171 = vunpack.c.l.b16 %v35
    %v172 = vunpack.c.l.b16 %v36
    %v173 = vunpack.c.l.b16 %v37
    %v174 = vunpack.c.l.b16 %v38
    %v175 = vunpack.c.l.b16 %v39
    %v176 = vunpack.c.l.b16 %v40
    %v177 = vunpack.c.l.b16 %v41
    %v178 = vunpack.c.l.b16 %v42
    %v179 = vunpack.c.l.b16 %v43
    %v180 = vunpack.c.l.b16 %v44
    %v181 = vunpack.c.l.b16 %v45
    %v182 = vunpack.c.l.b16 %v46
    %v183 = vunpack.c.l.b16 %v47
    %v184 = vunpack.c.l.b16 %v48
    %v185 = vunpack.c.l.b16 %v49
    %v186 = vunpack.c.l.b16 %v50
    %v187 = vunpack.c.l.b16 %v51
    %v188 = vunpack.c.l.b16 %v52
    %v189 = vunpack.c.l.b16 %v53
    %v190 = vunpack.c.l.b16 %v54
    %v191 = vunpack.c.l.b16 %v55
    %v192 = vunpack.c.l.b16 %v56
    %v193 = vunpack.c.l.b16 %v57
    %v194 = vunpack.c.l.b16 %v58
    %v195 = vunpack.c.l.b16 %v59
    %v196 = vunpack.c.l.b16 %v60
    %v197 = vunpack.c.l.b16 %v61
    %v198 = vunpack.c.l.b16 %v62
    %v199 = vunpack.c.l.b16 %v63
    %v200 = vunpack.c.l.b16 %v64
    %v201 = vunpack.c.l.b16 %v65
    %v202 = vunpack.c.l.b16 %v66
    %v203 = vunpack.c.l.b16 %v67
    %v204 = vunpack.c.l.b16 %v68
    %v205 = vunpack.c.l.b16 %v69
    %v206 = vunpack.c.l.b16 %v70
    %v207 = vunpack.c.l.b16 %v71
    %v208 = vunpack.c.l.b16 %v72
    %v209 = vunpack.c.l.b16 %v73
    %v210 = vunpack.c.l.b16 %v74
    %v211 = vunpack.c.l.b16 %v75
    %v212 = vunpack.c.l.b16 %v76
    %v213 = vunpack.c.l.b16 %v77
    %v214 = vunpack.c.l.b16 %v78
    %v215 = vunpack.c.l.b16 %v79
    %v216 = vunpack.c.l.b16 %v80
    %v217 = vunpack.c.l.b16 %v81
    %v218 = vunpack.c.l.b16 %v82
    %v219 = vunpack.c.l.b16 %v83
    %v220 = vunpack.c.l.b16 %v84
    %v221 = vunpack.c.l.b16 %v85
    %v222 = vunpack.c.l.b16 %v86
    %v223 = vunpack.c.l.b16 %v87
    %v224 = vunpack.c.l.b16 %v88
    %v225 = vunpack.c.l.b16 %v89
    %v226 = vunpack.c.l.b16 %v90
    %v227 = vunpack.c.l.b16 %v91
    %v228 = vpack.c.b16 %v165, %v164
    %v229 = vpack.c.b16 %v167, %v166
    %v230 = vpack.c.b16 %v169, %v168
    %v231 = vpack.c.b16 %v171, %v170
    %v232 = vpack.c.b16 %v173, %v172
    %v233 = vpack.c.b16 %v175, %v174
    %v234 = vpack.c.b16 %v177, %v176
    %v235 = vpack.c.b16 %v179, %v178
    %v236 = vpack.c.b16 %v181, %v180
    %v237 = vpack.c.b16 %v183, %v182
    %v238 = vpack.c.b16 %v185, %v184
    %v239 = vpack.c.b16 %v187, %v186
    %v240 = vpack.c.b16 %v189, %v188
    %v241 = vpack.c.b16 %v191, %v190
    %v242 = vpack.c.b16 %v193, %v192
    %v243 = vpack.c.b16 %v195, %v194
    %v244 = vpack.c.b16 %v197, %v196
    %v245 = vpack.c.b16 %v199, %v198
    %v246 = vpack.c.b16 %v201, %v200
    %v247 = vpack.c.b16 %v203, %v202
    %v248 = vpack.c.b16 %v205, %v204
    %v249 = vpack.c.b16 %v207, %v206
    %v250 = vpack.c.b16 %v209, %v208
    %v251 = vpack.c.b16 %v211, %v210
    %v252 = vpack.c.b16 %v213, %v212
    %v253 = vpack.c.b16 %v215, %v214
    %v254 = vpack.c.b16 %v217, %v216
    %v255 = vpack.c.b16 %v219, %v218
    %v256 = vpack.c.b16 %v221, %v220
    %v257 = vpack.c.b16 %v223, %v222
    %v258 = vpack.c.b16 %v225, %v224
    %v259 = vpack.c.b16 %v227, %v226
    %vm260 = vcmask 23552
    %v262 = vsel %vm260, %v228, 0
    %v265 = vsel %vm260, %v229, 0
    %v268 = vsel %vm260, %v230, 0
    %v271 = vsel %vm260, %v231, 0
    %v274 = vsel %vm260, %v232, 0
    %v277 = vsel %vm260, %v233, 0
    %v280 = vsel %vm260, %v234, 0
    %v283 = vsel %vm260, %v235, 0
    %v286 = vsel %vm260, %v236, 0
    %v289 = vsel %vm260, %v237, 0
    %v292 = vsel %vm260, %v238, 0
    %v295 = vsel %vm260, %v239, 0
    %v298 = vsel %vm260, %v240, 0
    %v301 = vsel %vm260, %v241, 0
    %v304 = vsel %vm260, %v242, 0
    %v307 = vsel %vm260, %v243, 0
    %v310 = vsel %vm260, %v244, 0
    %v313 = vsel %vm260, %v245, 0
    %v316 = vsel %vm260, %v246, 0
    %v319 = vsel %vm260, %v247, 0
    %v322 = vsel %vm260, %v248, 0
    %v325 = vsel %vm260, %v249, 0
    %v328 = vsel %vm260, %v250, 0
    %v331 = vsel %vm260, %v251, 0
    %v334 = vsel %vm260, %v252, 0
    %v337 = vsel %vm260, %v253, 0
    %v340 = vsel %vm260, %v254, 0
    %v343 = vsel %vm260, %v255, 0
    %v346 = vsel %vm260, %v256, 0
    %v349 = vsel %vm260, %v257, 0
    %v352 = vsel %vm260, %v258, 0
    %v355 = vsel %vm260, %v259, 0
    %vm357 = vcmask 1040384
    %vm358 = vcmask 1041408
    %v359 = vsel %vm357, 4294967295, 65535
    %v360 = vsel %vm358, %v359, 0
    %v362 = vand.u32 %v92, %v360
    %364 = vmatprep.subr.bf16.mxu0 0
    %365 = vmatpush1.bf16.msra.mxu0 %v362
    %366 = vmatprep.subr.bf16.mxu0 0
    %367 = vmatpush1.bf16.msra.mxu0 0
    %368 = vmatprep.subr.bf16.mxu0 0
    %369 = vmatpush1.bf16.msra.mxu0 0
    %370 = vmatprep.subr.bf16.mxu0 0
    %371 = vmatpush1.bf16.msra.mxu0 0
    %372 = vmatprep.subr.bf16.mxu0 0
    %373 = vmatpush1.bf16.msra.mxu0 0
    %374 = vmatprep.subr.bf16.mxu0 0
    %375 = vmatpush1.bf16.msra.mxu0 0
    %376 = vmatprep.subr.bf16.mxu0 0
    %377 = vmatpush1.bf16.msra.mxu0 0
    %378 = vmatprep.subr.bf16.mxu0 0
    %379 = vmatpush1.bf16.msra.mxu0 0
    %380 = vmatprep.subr.bf16.mxu0 0
    %381 = vmatpush1.bf16.msra.mxu0 0
    %382 = vmatprep.subr.bf16.mxu0 0
    %383 = vmatpush1.bf16.msra.mxu0 0
    %384 = vmatprep.subr.bf16.mxu0 0
    %385 = vmatpush1.bf16.msra.mxu0 0
    %386 = vmatprep.subr.bf16.mxu0 0
    %387 = vmatpush1.bf16.msra.mxu0 0
    %388 = vmatprep.subr.bf16.mxu0 0
    %389 = vmatpush1.bf16.msra.mxu0 0
    %390 = vmatprep.subr.bf16.mxu0 0
    %391 = vmatpush1.bf16.msra.mxu0 0
    %392 = vmatprep.subr.bf16.mxu0 0
    %393 = vmatpush1.bf16.msra.mxu0 0
    %394 = vmatprep.subr.bf16.mxu0 0
    %395 = vmatpush1.bf16.msra.mxu0 0
    %396 = vmatprep.mubr.bf16.mxu0 0
    %397 = vmatmul.mubr.bf16.gmra.mrb[0].mxu0 %v262
    %v398 = vpop.f32.mrb[0].mxu0
    %v399 = vadd.f32 %v98, %v398
    %v400 = vpop.f32.mrb[0].mxu0
    %v401 = vpop.f32.mrb[0].mxu0
    %v402 = vadd.f32 %v98, %v401
    %v403 = vpop.f32.mrb[0].mxu0
    %404 = vmatprep.mubr.bf16.mxu0 0
    %405 = vmatmul.mubr.bf16.gmra.mrb[0].mxu0 %v265
    %v406 = vpop.f32.mrb[0].mxu0
    %v407 = vadd.f32 %v98, %v406
    %v408 = vpop.f32.mrb[0].mxu0
    %v409 = vpop.f32.mrb[0].mxu0
    %v410 = vadd.f32 %v98, %v409
    %v411 = vpop.f32.mrb[0].mxu0
    %412 = vmatprep.mubr.bf16.mxu0 0
    %413 = vmatmul.mubr.bf16.gmra.mrb[0].mxu0 %v268
    %v414 = vpop.f32.mrb[0].mxu0
    %v415 = vadd.f32 %v98, %v414
    %v416 = vpop.f32.mrb[0].mxu0
    %v417 = vpop.f32.mrb[0].mxu0
    %v418 = vadd.f32 %v98, %v417
    %v419 = vpop.f32.mrb[0].mxu0
    %420 = vmatprep.mubr.bf16.mxu0 0
    %421 = vmatmul.mubr.bf16.gmra.mrb[0].mxu0 %v271
    %v422 = vpop.f32.mrb[0].mxu0
    %v423 = vadd.f32 %v98, %v422
    %v424 = vpop.f32.mrb[0].mxu0
    %v425 = vpop.f32.mrb[0].mxu0
    %v426 = vadd.f32 %v98, %v425
    %v427 = vpop.f32.mrb[0].mxu0
    %428 = vmatprep.mubr.bf16.mxu0 0
    %429 = vmatmul.mubr.bf16.gmra.mrb[0].mxu0 %v274
    %v430 = vpop.f32.mrb[0].mxu0
    %v431 = vadd.f32 %v98, %v430
    %v432 = vpop.f32.mrb[0].mxu0
    %v433 = vpop.f32.mrb[0].mxu0
    %v434 = vadd.f32 %v98, %v433
    %v435 = vpop.f32.mrb[0].mxu0
    %436 = vmatprep.mubr.bf16.mxu0 0
    %437 = vmatmul.mubr.bf16.gmra.mrb[0].mxu0 %v277
    %v438 = vpop.f32.mrb[0].mxu0
    %v439 = vadd.f32 %v98, %v438
    %v440 = vpop.f32.mrb[0].mxu0
    %v441 = vpop.f32.mrb[0].mxu0
    %v442 = vadd.f32 %v98, %v441
    %v443 = vpop.f32.mrb[0].mxu0
    %444 = vmatprep.mubr.bf16.mxu0 0
    %445 = vmatmul.mubr.bf16.gmra.mrb[0].mxu0 %v280
    %v446 = vpop.f32.mrb[0].mxu0
    %v447 = vadd.f32 %v98, %v446
    %v448 = vpop.f32.mrb[0].mxu0
    %v449 = vpop.f32.mrb[0].mxu0
    %v450 = vadd.f32 %v98, %v449
    %v451 = vpop.f32.mrb[0].mxu0
    %452 = vmatprep.mubr.bf16.mxu0 0
    %453 = vmatmul.mubr.bf16.gmra.mrb[0].mxu0 %v283
    %v454 = vpop.f32.mrb[0].mxu0
    %v455 = vadd.f32 %v98, %v454
    %v456 = vpop.f32.mrb[0].mxu0
    %v457 = vpop.f32.mrb[0].mxu0
    %v458 = vadd.f32 %v98, %v457
    %v459 = vpop.f32.mrb[0].mxu0
    %460 = vmatprep.mubr.bf16.mxu0 0
    %461 = vmatmul.mubr.bf16.gmra.mrb[0].mxu0 %v286
    %v462 = vpop.f32.mrb[0].mxu0
    %v463 = vadd.f32 %v98, %v462
    %v464 = vpop.f32.mrb[0].mxu0
    %v465 = vpop.f32.mrb[0].mxu0
    %v466 = vadd.f32 %v98, %v465
    %v467 = vpop.f32.mrb[0].mxu0
    %468 = vmatprep.mubr.bf16.mxu0 0
    %469 = vmatmul.mubr.bf16.gmra.mrb[0].mxu0 %v289
    %v470 = vpop.f32.mrb[0].mxu0
    %v471 = vadd.f32 %v98, %v470
    %v472 = vpop.f32.mrb[0].mxu0
    %v473 = vpop.f32.mrb[0].mxu0
    %v474 = vadd.f32 %v98, %v473
    %v475 = vpop.f32.mrb[0].mxu0
    %476 = vmatprep.mubr.bf16.mxu0 0
    %477 = vmatmul.mubr.bf16.gmra.mrb[0].mxu0 %v292
    %v478 = vpop.f32.mrb[0].mxu0
    %v479 = vadd.f32 %v98, %v478
    %v480 = vpop.f32.mrb[0].mxu0
    %v481 = vpop.f32.mrb[0].mxu0
    %v482 = vadd.f32 %v98, %v481
    %v483 = vpop.f32.mrb[0].mxu0
    %484 = vmatprep.mubr.bf16.mxu0 0
    %485 = vmatmul.mubr.bf16.gmra.mrb[0].mxu0 %v295
    %v486 = vpop.f32.mrb[0].mxu0
    %v487 = vadd.f32 %v98, %v486
    %v488 = vpop.f32.mrb[0].mxu0
    %v489 = vpop.f32.mrb[0].mxu0
    %v490 = vadd.f32 %v98, %v489
    %v491 = vpop.f32.mrb[0].mxu0
    %492 = vmatprep.mubr.bf16.mxu0 0
    %493 = vmatmul.mubr.bf16.gmra.mrb[0].mxu0 %v298
    %v494 = vpop.f32.mrb[0].mxu0
    %v495 = vadd.f32 %v98, %v494
    %v496 = vpop.f32.mrb[0].mxu0
    %v497 = vpop.f32.mrb[0].mxu0
    %v498 = vadd.f32 %v98, %v497
    %v499 = vpop.f32.mrb[0].mxu0
    %500 = vmatprep.mubr.bf16.mxu0 0
    %501 = vmatmul.mubr.bf16.gmra.mrb[0].mxu0 %v301
    %v502 = vpop.f32.mrb[0].mxu0
    %v503 = vadd.f32 %v98, %v502
    %v504 = vpop.f32.mrb[0].mxu0
    %v505 = vpop.f32.mrb[0].mxu0
    %v506 = vadd.f32 %v98, %v505
    %v507 = vpop.f32.mrb[0].mxu0
    %508 = vmatprep.mubr.bf16.mxu0 0
    %509 = vmatmul.mubr.bf16.gmra.mrb[0].mxu0 %v304
    %v510 = vpop.f32.mrb[0].mxu0
    %v511 = vadd.f32 %v98, %v510
    %v512 = vpop.f32.mrb[0].mxu0
    %v513 = vpop.f32.mrb[0].mxu0
    %v514 = vadd.f32 %v98, %v513
    %v515 = vpop.f32.mrb[0].mxu0
    %516 = vmatprep.mubr.bf16.mxu0 0
    %517 = vmatmul.mubr.bf16.gmra.mrb[0].mxu0 %v307
    %v518 = vpop.f32.mrb[0].mxu0
    %v519 = vadd.f32 %v98, %v518
    %v520 = vpop.f32.mrb[0].mxu0
    %v521 = vpop.f32.mrb[0].mxu0
    %v522 = vadd.f32 %v98, %v521
    %v523 = vpop.f32.mrb[0].mxu0
    %524 = vmatprep.mubr.bf16.mxu0 0
    %525 = vmatmul.mubr.bf16.gmra.mrb[0].mxu0 %v310
    %v526 = vpop.f32.mrb[0].mxu0
    %v527 = vadd.f32 %v98, %v526
    %v528 = vpop.f32.mrb[0].mxu0
    %v529 = vpop.f32.mrb[0].mxu0
    %v530 = vadd.f32 %v98, %v529
    %v531 = vpop.f32.mrb[0].mxu0
    %532 = vmatprep.mubr.bf16.mxu0 0
    %533 = vmatmul.mubr.bf16.gmra.mrb[0].mxu0 %v313
    %v534 = vpop.f32.mrb[0].mxu0
    %v535 = vadd.f32 %v98, %v534
    %v536 = vpop.f32.mrb[0].mxu0
    %v537 = vpop.f32.mrb[0].mxu0
    %v538 = vadd.f32 %v98, %v537
    %v539 = vpop.f32.mrb[0].mxu0
    %540 = vmatprep.mubr.bf16.mxu0 0
    %541 = vmatmul.mubr.bf16.gmra.mrb[0].mxu0 %v316
    %v542 = vpop.f32.mrb[0].mxu0
    %v543 = vadd.f32 %v98, %v542
    %v544 = vpop.f32.mrb[0].mxu0
    %v545 = vpop.f32.mrb[0].mxu0
    %v546 = vadd.f32 %v98, %v545
    %v547 = vpop.f32.mrb[0].mxu0
    %548 = vmatprep.mubr.bf16.mxu0 0
    %549 = vmatmul.mubr.bf16.gmra.mrb[0].mxu0 %v319
    %v550 = vpop.f32.mrb[0].mxu0
    %v551 = vadd.f32 %v98, %v550
    %v552 = vpop.f32.mrb[0].mxu0
    %v553 = vpop.f32.mrb[0].mxu0
    %v554 = vadd.f32 %v98, %v553
    %v555 = vpop.f32.mrb[0].mxu0
    %556 = vmatprep.mubr.bf16.mxu0 0
    %557 = vmatmul.mubr.bf16.gmra.mrb[0].mxu0 %v322
    %v558 = vpop.f32.mrb[0].mxu0
    %v559 = vadd.f32 %v98, %v558
    %v560 = vpop.f32.mrb[0].mxu0
    %v561 = vpop.f32.mrb[0].mxu0
    %v562 = vadd.f32 %v98, %v561
    %v563 = vpop.f32.mrb[0].mxu0
    %564 = vmatprep.mubr.bf16.mxu0 0
    %565 = vmatmul.mubr.bf16.gmra.mrb[0].mxu0 %v325
    %v566 = vpop.f32.mrb[0].mxu0
    %v567 = vadd.f32 %v98, %v566
    %v568 = vpop.f32.mrb[0].mxu0
    %v569 = vpop.f32.mrb[0].mxu0
    %v570 = vadd.f32 %v98, %v569
    %v571 = vpop.f32.mrb[0].mxu0
    %572 = vmatprep.mubr.bf16.mxu0 0
    %573 = vmatmul.mubr.bf16.gmra.mrb[0].mxu0 %v328
    %v574 = vpop.f32.mrb[0].mxu0
    %v575 = vadd.f32 %v98, %v574
    %v576 = vpop.f32.mrb[0].mxu0
    %v577 = vpop.f32.mrb[0].mxu0
    %v578 = vadd.f32 %v98, %v577
    %v579 = vpop.f32.mrb[0].mxu0
    %580 = vmatprep.mubr.bf16.mxu0 0
    %581 = vmatmul.mubr.bf16.gmra.mrb[0].mxu0 %v331
    %v582 = vpop.f32.mrb[0].mxu0
    %v583 = vadd.f32 %v98, %v582
    %v584 = vpop.f32.mrb[0].mxu0
    %v585 = vpop.f32.mrb[0].mxu0
    %v586 = vadd.f32 %v98, %v585
    %v587 = vpop.f32.mrb[0].mxu0
    %588 = vmatprep.mubr.bf16.mxu0 0
    %589 = vmatmul.mubr.bf16.gmra.mrb[0].mxu0 %v334
    %v590 = vpop.f32.mrb[0].mxu0
    %v591 = vadd.f32 %v98, %v590
    %v592 = vpop.f32.mrb[0].mxu0
    %v593 = vpop.f32.mrb[0].mxu0
    %v594 = vadd.f32 %v98, %v593
    %v595 = vpop.f32.mrb[0].mxu0
    %596 = vmatprep.mubr.bf16.mxu0 0
    %597 = vmatmul.mubr.bf16.gmra.mrb[0].mxu0 %v337
    %v598 = vpop.f32.mrb[0].mxu0
    %v599 = vadd.f32 %v98, %v598
    %v600 = vpop.f32.mrb[0].mxu0
    %v601 = vpop.f32.mrb[0].mxu0
    %v602 = vadd.f32 %v98, %v601
    %v603 = vpop.f32.mrb[0].mxu0
    %604 = vmatprep.mubr.bf16.mxu0 0
    %605 = vmatmul.mubr.bf16.gmra.mrb[0].mxu0 %v340
    %v606 = vpop.f32.mrb[0].mxu0
    %v607 = vadd.f32 %v98, %v606
    %v608 = vpop.f32.mrb[0].mxu0
    %v609 = vpop.f32.mrb[0].mxu0
    %v610 = vadd.f32 %v98, %v609
    %v611 = vpop.f32.mrb[0].mxu0
    %612 = vmatprep.mubr.bf16.mxu0 0
    %613 = vmatmul.mubr.bf16.gmra.mrb[0].mxu0 %v343
    %v614 = vpop.f32.mrb[0].mxu0
    %v615 = vadd.f32 %v98, %v614
    %v616 = vpop.f32.mrb[0].mxu0
    %v617 = vpop.f32.mrb[0].mxu0
    %v618 = vadd.f32 %v98, %v617
    %v619 = vpop.f32.mrb[0].mxu0
    %620 = vmatprep.mubr.bf16.mxu0 0
    %621 = vmatmul.mubr.bf16.gmra.mrb[0].mxu0 %v346
    %v622 = vpop.f32.mrb[0].mxu0
    %v623 = vadd.f32 %v98, %v622
    %v624 = vpop.f32.mrb[0].mxu0
    %v625 = vpop.f32.mrb[0].mxu0
    %v626 = vadd.f32 %v98, %v625
    %v627 = vpop.f32.mrb[0].mxu0
    %628 = vmatprep.mubr.bf16.mxu0 0
    %629 = vmatmul.mubr.bf16.gmra.mrb[0].mxu0 %v349
    %v630 = vpop.f32.mrb[0].mxu0
    %v631 = vadd.f32 %v98, %v630
    %v632 = vpop.f32.mrb[0].mxu0
    %v633 = vpop.f32.mrb[0].mxu0
    %v634 = vadd.f32 %v98, %v633
    %v635 = vpop.f32.mrb[0].mxu0
    %636 = vmatprep.mubr.bf16.mxu0 0
    %637 = vmatmul.mubr.bf16.gmra.mrb[0].mxu0 %v352
    %v638 = vpop.f32.mrb[0].mxu0
    %v639 = vadd.f32 %v98, %v638
    %v640 = vpop.f32.mrb[0].mxu0
    %v641 = vpop.f32.mrb[0].mxu0
    %v642 = vadd.f32 %v98, %v641
    %v643 = vpop.f32.mrb[0].mxu0
    %644 = vmatprep.mubr.bf16.mxu0 0
    %645 = vmatmul.mubr.bf16.gmra.mrb[0].mxu0 %v355
    %v646 = vpop.f32.mrb[0].mxu0
    %v647 = vadd.f32 %v98, %v646
    %v648 = vpop.f32.mrb[0].mxu0
    %v649 = vpop.f32.mrb[0].mxu0
    %v650 = vadd.f32 %v98, %v649
    %v651 = vpop.f32.mrb[0].mxu0
    %652 = vdwg.mxu0
    %vm653 = vcmp.ge.f32.partialorder %v399, 0.0
    %vm654 = vcmp.ge.f32.partialorder %v402, 0.0
    %vm655 = vcmp.ge.f32.partialorder %v407, 0.0
    %vm656 = vcmp.ge.f32.partialorder %v410, 0.0
    %vm657 = vcmp.ge.f32.partialorder %v415, 0.0
    %vm658 = vcmp.ge.f32.partialorder %v418, 0.0
    %vm659 = vcmp.ge.f32.partialorder %v423, 0.0
    %vm660 = vcmp.ge.f32.partialorder %v426, 0.0
    %vm661 = vcmp.ge.f32.partialorder %v431, 0.0
    %vm662 = vcmp.ge.f32.partialorder %v434, 0.0
    %vm663 = vcmp.ge.f32.partialorder %v439, 0.0
    %vm664 = vcmp.ge.f32.partialorder %v442, 0.0
    %vm665 = vcmp.ge.f32.partialorder %v447, 0.0
    %vm666 = vcmp.ge.f32.partialorder %v450, 0.0
    %vm667 = vcmp.ge.f32.partialorder %v455, 0.0
    %vm668 = vcmp.ge.f32.partialorder %v458, 0.0
    %vm669 = vcmp.ge.f32.partialorder %v463, 0.0
    %vm670 = vcmp.ge.f32.partialorder %v466, 0.0
    %vm671 = vcmp.ge.f32.partialorder %v471, 0.0
    %vm672 = vcmp.ge.f32.partialorder %v474, 0.0
    %vm673 = vcmp.ge.f32.partialorder %v479, 0.0
    %vm674 = vcmp.ge.f32.partialorder %v482, 0.0
    %vm675 = vcmp.ge.f32.partialorder %v487, 0.0
    %vm676 = vcmp.ge.f32.partialorder %v490, 0.0
    %vm677 = vcmp.ge.f32.partialorder %v495, 0.0
    %vm678 = vcmp.ge.f32.partialorder %v498, 0.0
    %vm679 = vcmp.ge.f32.partialorder %v503, 0.0
    %vm680 = vcmp.ge.f32.partialorder %v506, 0.0
    %vm681 = vcmp.ge.f32.partialorder %v511, 0.0
    %vm682 = vcmp.ge.f32.partialorder %v514, 0.0
    %vm683 = vcmp.ge.f32.partialorder %v519, 0.0
    %vm684 = vcmp.ge.f32.partialorder %v522, 0.0
    %vm685 = vcmp.ge.f32.partialorder %v527, 0.0
    %vm686 = vcmp.ge.f32.partialorder %v530, 0.0
    %vm687 = vcmp.ge.f32.partialorder %v535, 0.0
    %vm688 = vcmp.ge.f32.partialorder %v538, 0.0
    %vm689 = vcmp.ge.f32.partialorder %v543, 0.0
    %vm690 = vcmp.ge.f32.partialorder %v546, 0.0
    %vm691 = vcmp.ge.f32.partialorder %v551, 0.0
    %vm692 = vcmp.ge.f32.partialorder %v554, 0.0
    %vm693 = vcmp.ge.f32.partialorder %v559, 0.0
    %vm694 = vcmp.ge.f32.partialorder %v562, 0.0
    %vm695 = vcmp.ge.f32.partialorder %v567, 0.0
    %vm696 = vcmp.ge.f32.partialorder %v570, 0.0
    %vm697 = vcmp.ge.f32.partialorder %v575, 0.0
    %vm698 = vcmp.ge.f32.partialorder %v578, 0.0
    %vm699 = vcmp.ge.f32.partialorder %v583, 0.0
    %vm700 = vcmp.ge.f32.partialorder %v586, 0.0
    %vm701 = vcmp.ge.f32.partialorder %v591, 0.0
    %vm702 = vcmp.ge.f32.partialorder %v594, 0.0
    %vm703 = vcmp.ge.f32.partialorder %v599, 0.0
    %vm704 = vcmp.ge.f32.partialorder %v602, 0.0
    %vm705 = vcmp.ge.f32.partialorder %v607, 0.0
    %vm706 = vcmp.ge.f32.partialorder %v610, 0.0
    %vm707 = vcmp.ge.f32.partialorder %v615, 0.0
    %vm708 = vcmp.ge.f32.partialorder %v618, 0.0
    %vm709 = vcmp.ge.f32.partialorder %v623, 0.0
    %vm710 = vcmp.ge.f32.partialorder %v626, 0.0
    %vm711 = vcmp.ge.f32.partialorder %v631, 0.0
    %vm712 = vcmp.ge.f32.partialorder %v634, 0.0
    %vm713 = vcmp.ge.f32.partialorder %v639, 0.0
    %vm714 = vcmp.ge.f32.partialorder %v642, 0.0
    %vm715 = vcmp.ge.f32.partialorder %v647, 0.0
    %vm716 = vcmp.ge.f32.partialorder %v650, 0.0
    %v717 = vmul.f32 %v399, 0.2
    %v718 = vmul.f32 %v402, 0.2
    %v719 = vmul.f32 %v407, 0.2
    %v720 = vmul.f32 %v410, 0.2
    %v721 = vmul.f32 %v415, 0.2
    %v722 = vmul.f32 %v418, 0.2
    %v723 = vmul.f32 %v423, 0.2
    %v724 = vmul.f32 %v426, 0.2
    %v725 = vmul.f32 %v431, 0.2
    %v726 = vmul.f32 %v434, 0.2
    %v727 = vmul.f32 %v439, 0.2
    %v728 = vmul.f32 %v442, 0.2
    %v729 = vmul.f32 %v447, 0.2
    %v730 = vmul.f32 %v450, 0.2
    %v731 = vmul.f32 %v455, 0.2
    %v732 = vmul.f32 %v458, 0.2
    %v733 = vmul.f32 %v463, 0.2
    %v734 = vmul.f32 %v466, 0.2
    %v735 = vmul.f32 %v471, 0.2
    %v736 = vmul.f32 %v474, 0.2
    %v737 = vmul.f32 %v479, 0.2
    %v738 = vmul.f32 %v482, 0.2
    %v739 = vmul.f32 %v487, 0.2
    %v740 = vmul.f32 %v490, 0.2
    %v741 = vmul.f32 %v495, 0.2
    %v742 = vmul.f32 %v498, 0.2
    %v743 = vmul.f32 %v503, 0.2
    %v744 = vmul.f32 %v506, 0.2
    %v745 = vmul.f32 %v511, 0.2
    %v746 = vmul.f32 %v514, 0.2
    %v747 = vmul.f32 %v519, 0.2
    %v748 = vmul.f32 %v522, 0.2
    %v749 = vmul.f32 %v527, 0.2
    %v750 = vmul.f32 %v530, 0.2
    %v751 = vmul.f32 %v535, 0.2
    %v752 = vmul.f32 %v538, 0.2
    %v753 = vmul.f32 %v543, 0.2
    %v754 = vmul.f32 %v546, 0.2
    %v755 = vmul.f32 %v551, 0.2
    %v756 = vmul.f32 %v554, 0.2
    %v757 = vmul.f32 %v559, 0.2
    %v758 = vmul.f32 %v562, 0.2
    %v759 = vmul.f32 %v567, 0.2
    %v760 = vmul.f32 %v570, 0.2
    %v761 = vmul.f32 %v575, 0.2
    %v762 = vmul.f32 %v578, 0.2
    %v763 = vmul.f32 %v583, 0.2
    %v764 = vmul.f32 %v586, 0.2
    %v765 = vmul.f32 %v591, 0.2
    %v766 = vmul.f32 %v594, 0.2
    %v767 = vmul.f32 %v599, 0.2
    %v768 = vmul.f32 %v602, 0.2
    %v769 = vmul.f32 %v607, 0.2
    %v770 = vmul.f32 %v610, 0.2
    %v771 = vmul.f32 %v615, 0.2
    %v772 = vmul.f32 %v618, 0.2
    %v773 = vmul.f32 %v623, 0.2
    %v774 = vmul.f32 %v626, 0.2
    %v775 = vmul.f32 %v631, 0.2
    %v776 = vmul.f32 %v634, 0.2
    %v777 = vmul.f32 %v639, 0.2
    %v778 = vmul.f32 %v642, 0.2
    %v779 = vmul.f32 %v647, 0.2
    %v780 = vmul.f32 %v650, 0.2
    %v781 = vsel %vm653, %v399, %v717
    %v782 = vsel %vm654, %v402, %v718
    %v783 = vsel %vm655, %v407, %v719
    %v784 = vsel %vm656, %v410, %v720
    %v785 = vsel %vm657, %v415, %v721
    %v786 = vsel %vm658, %v418, %v722
    %v787 = vsel %vm659, %v423, %v723
    %v788 = vsel %vm660, %v426, %v724
    %v789 = vsel %vm661, %v431, %v725
    %v790 = vsel %vm662, %v434, %v726
    %v791 = vsel %vm663, %v439, %v727
    %v792 = vsel %vm664, %v442, %v728
    %v793 = vsel %vm665, %v447, %v729
    %v794 = vsel %vm666, %v450, %v730
    %v795 = vsel %vm667, %v455, %v731
    %v796 = vsel %vm668, %v458, %v732
    %v797 = vsel %vm669, %v463, %v733
    %v798 = vsel %vm670, %v466, %v734
    %v799 = vsel %vm671, %v471, %v735
    %v800 = vsel %vm672, %v474, %v736
    %v801 = vsel %vm673, %v479, %v737
    %v802 = vsel %vm674, %v482, %v738
    %v803 = vsel %vm675, %v487, %v739
    %v804 = vsel %vm676, %v490, %v740
    %v805 = vsel %vm677, %v495, %v741
    %v806 = vsel %vm678, %v498, %v742
    %v807 = vsel %vm679, %v503, %v743
    %v808 = vsel %vm680, %v506, %v744
    %v809 = vsel %vm681, %v511, %v745
    %v810 = vsel %vm682, %v514, %v746
    %v811 = vsel %vm683, %v519, %v747
    %v812 = vsel %vm684, %v522, %v748
    %v813 = vsel %vm685, %v527, %v749
    %v814 = vsel %vm686, %v530, %v750
    %v815 = vsel %vm687, %v535, %v751
    %v816 = vsel %vm688, %v538, %v752
    %v817 = vsel %vm689, %v543, %v753
    %v818 = vsel %vm690, %v546, %v754
    %v819 = vsel %vm691, %v551, %v755
    %v820 = vsel %vm692, %v554, %v756
    %v821 = vsel %vm693, %v559, %v757
    %v822 = vsel %vm694, %v562, %v758
    %v823 = vsel %vm695, %v567, %v759
    %v824 = vsel %vm696, %v570, %v760
    %v825 = vsel %vm697, %v575, %v761
    %v826 = vsel %vm698, %v578, %v762
    %v827 = vsel %vm699, %v583, %v763
    %v828 = vsel %vm700, %v586, %v764
    %v829 = vsel %vm701, %v591, %v765
    %v830 = vsel %vm702, %v594, %v766
    %v831 = vsel %vm703, %v599, %v767
    %v832 = vsel %vm704, %v602, %v768
    %v833 = vsel %vm705, %v607, %v769
    %v834 = vsel %vm706, %v610, %v770
    %v835 = vsel %vm707, %v615, %v771
    %v836 = vsel %vm708, %v618, %v772
    %v837 = vsel %vm709, %v623, %v773
    %v838 = vsel %vm710, %v626, %v774
    %v839 = vsel %vm711, %v631, %v775
    %v840 = vsel %vm712, %v634, %v776
    %v841 = vsel %vm713, %v639, %v777
    %v842 = vsel %vm714, %v642, %v778
    %v843 = vsel %vm715, %v647, %v779
    %v844 = vsel %vm716, %v650, %v780
    %v845 = vld [vmem:[%s3] sm:$0xf]
    %v846 = vld [vmem:[%s3 + $0x4] sm:$0xf]
    %v847 = vld [vmem:[%s3 + $0x8] sm:$0xf]
    %v848 = vld [vmem:[%s3 + $0xc] sm:$0xf]
    %v849 = vld [vmem:[%s4] sm:$0x1]
    %v850 = vpack.c.bf16 %v782, %v781
    %v851 = vpack.c.bf16 %v784, %v783
    %v852 = vpack.c.bf16 %v786, %v785
    %v853 = vpack.c.bf16 %v788, %v787
    %v854 = vpack.c.bf16 %v790, %v789
    %v855 = vpack.c.bf16 %v792, %v791
    %v856 = vpack.c.bf16 %v794, %v793
    %v857 = vpack.c.bf16 %v796, %v795
    %v858 = vpack.c.bf16 %v798, %v797
    %v859 = vpack.c.bf16 %v800, %v799
    %v860 = vpack.c.bf16 %v802, %v801
    %v861 = vpack.c.bf16 %v804, %v803
    %v862 = vpack.c.bf16 %v806, %v805
    %v863 = vpack.c.bf16 %v808, %v807
    %v864 = vpack.c.bf16 %v810, %v809
    %v865 = vpack.c.bf16 %v812, %v811
    %v866 = vpack.c.bf16 %v814, %v813
    %v867 = vpack.c.bf16 %v816, %v815
    %v868 = vpack.c.bf16 %v818, %v817
    %v869 = vpack.c.bf16 %v820, %v819
    %v870 = vpack.c.bf16 %v822, %v821
    %v871 = vpack.c.bf16 %v824, %v823
    %v872 = vpack.c.bf16 %v826, %v825
    %v873 = vpack.c.bf16 %v828, %v827
    %v874 = vpack.c.bf16 %v830, %v829
    %v875 = vpack.c.bf16 %v832, %v831
    %v876 = vpack.c.bf16 %v834, %v833
    %v877 = vpack.c.bf16 %v836, %v835
    %v878 = vpack.c.bf16 %v838, %v837
    %v879 = vpack.c.bf16 %v840, %v839
    %v880 = vpack.c.bf16 %v842, %v841
    %v881 = vpack.c.bf16 %v844, %v843
    %v883 = vlaneseq
    %v884 = vshrl.u32 %v883, 7
    %v885 = vsub.s32 0, %v884
    %v886 = vrot.slane %v849, %v885
    %v892 = vunpack.c.l.b16 %v845
    %v893 = vunpack.c.l.b16 %v846
    %v894 = vunpack.c.l.b16 %v847
    %v895 = vunpack.c.l.b16 %v848
    %v896 = vpack.c.b16 %v893, %v892
    %v897 = vpack.c.b16 %v895, %v894
    %vm900 = vcmask 261120
    %v902 = vsel %vm900, %v850, 0
    %v905 = vsel %vm900, %v851, 0
    %v908 = vsel %vm900, %v852, 0
    %v911 = vsel %vm900, %v853, 0
    %v914 = vsel %vm900, %v854, 0
    %v917 = vsel %vm900, %v855, 0
    %v920 = vsel %vm900, %v856, 0
    %v923 = vsel %vm900, %v857, 0
    %v926 = vsel %vm900, %v858, 0
    %v929 = vsel %vm900, %v859, 0
    %v932 = vsel %vm900, %v860, 0
    %v935 = vsel %vm900, %v861, 0
    %v938 = vsel %vm900, %v862, 0
    %v941 = vsel %vm900, %v863, 0
    %v944 = vsel %vm900, %v864, 0
    %v947 = vsel %vm900, %v865, 0
    %v950 = vsel %vm900, %v866, 0
    %v953 = vsel %vm900, %v867, 0
    %v956 = vsel %vm900, %v868, 0
    %v959 = vsel %vm900, %v869, 0
    %v962 = vsel %vm900, %v870, 0
    %v965 = vsel %vm900, %v871, 0
    %v968 = vsel %vm900, %v872, 0
    %v971 = vsel %vm900, %v873, 0
    %v974 = vsel %vm900, %v874, 0
    %v977 = vsel %vm900, %v875, 0
    %v980 = vsel %vm900, %v876, 0
    %v983 = vsel %vm900, %v877, 0
    %v986 = vsel %vm900, %v878, 0
    %v989 = vsel %vm900, %v879, 0
    %v992 = vsel %vm900, %v880, 0
    %v995 = vsel %vm900, %v881, 0
    %997 = vmatprep.subr.bf16.mxu0 0
    %998 = vmatpush1.bf16.msra.mxu0 %v896
    %999 = vmatprep.subr.bf16.mxu0 0
    %1000 = vmatpush1.bf16.msra.mxu0 %v897
    %1001 = vmatprep.subr.bf16.mxu0 0
    %1002 = vmatpush1.bf16.msra.mxu0 0
    %1003 = vmatprep.subr.bf16.mxu0 0
    %1004 = vmatpush1.bf16.msra.mxu0 0
    %1005 = vmatprep.subr.bf16.mxu0 0
    %1006 = vmatpush1.bf16.msra.mxu0 0
    %1007 = vmatprep.subr.bf16.mxu0 0
    %1008 = vmatpush1.bf16.msra.mxu0 0
    %1009 = vmatprep.subr.bf16.mxu0 0
    %1010 = vmatpush1.bf16.msra.mxu0 0
    %1011 = vmatprep.subr.bf16.mxu0 0
    %1012 = vmatpush1.bf16.msra.mxu0 0
    %1013 = vmatprep.subr.bf16.mxu0 0
    %1014 = vmatpush1.bf16.msra.mxu0 0
    %1015 = vmatprep.subr.bf16.mxu0 0
    %1016 = vmatpush1.bf16.msra.mxu0 0
    %1017 = vmatprep.subr.bf16.mxu0 0
    %1018 = vmatpush1.bf16.msra.mxu0 0
    %1019 = vmatprep.subr.bf16.mxu0 0
    %1020 = vmatpush1.bf16.msra.mxu0 0
    %1021 = vmatprep.subr.bf16.mxu0 0
    %1022 = vmatpush1.bf16.msra.mxu0 0
    %1023 = vmatprep.subr.bf16.mxu0 0
    %1024 = vmatpush1.bf16.msra.mxu0 0
    %1025 = vmatprep.subr.bf16.mxu0 0
    %1026 = vmatpush1.bf16.msra.mxu0 0
    %1027 = vmatprep.subr.bf16.mxu0 0
    %1028 = vmatpush1.bf16.msra.mxu0 0
    %1029 = vmatprep.mubr.bf16.mxu0 0
    %1030 = vmatmul.mubr.bf16.gmra.mrb[0].mxu0 %v902
    %v1031 = vpop.f32.mrb[0].mxu0
    %v1032 = vadd.f32 %v886, %v1031
    %v1033 = vpop.f32.mrb[0].mxu0
    %v1034 = vpop.f32.mrb[0].mxu0
    %v1035 = vadd.f32 %v886, %v1034
    %v1036 = vpop.f32.mrb[0].mxu0
    %1037 = vmatprep.mubr.bf16.mxu0 0
    %1038 = vmatmul.mubr.bf16.gmra.mrb[0].mxu0 %v905
    %v1039 = vpop.f32.mrb[0].mxu0
    %v1040 = vadd.f32 %v886, %v1039
    %v1041 = vpop.f32.mrb[0].mxu0
    %v1042 = vpop.f32.mrb[0].mxu0
    %v1043 = vadd.f32 %v886, %v1042
    %v1044 = vpop.f32.mrb[0].mxu0
    %1045 = vmatprep.mubr.bf16.mxu0 0
    %1046 = vmatmul.mubr.bf16.gmra.mrb[0].mxu0 %v908
    %v1047 = vpop.f32.mrb[0].mxu0
    %v1048 = vadd.f32 %v886, %v1047
    %v1049 = vpop.f32.mrb[0].mxu0
    %v1050 = vpop.f32.mrb[0].mxu0
    %v1051 = vadd.f32 %v886, %v1050
    %v1052 = vpop.f32.mrb[0].mxu0
    %1053 = vmatprep.mubr.bf16.mxu0 0
    %1054 = vmatmul.mubr.bf16.gmra.mrb[0].mxu0 %v911
    %v1055 = vpop.f32.mrb[0].mxu0
    %v1056 = vadd.f32 %v886, %v1055
    %v1057 = vpop.f32.mrb[0].mxu0
    %v1058 = vpop.f32.mrb[0].mxu0
    %v1059 = vadd.f32 %v886, %v1058
    %v1060 = vpop.f32.mrb[0].mxu0
    %1061 = vmatprep.mubr.bf16.mxu0 0
    %1062 = vmatmul.mubr.bf16.gmra.mrb[0].mxu0 %v914
    %v1063 = vpop.f32.mrb[0].mxu0
    %v1064 = vadd.f32 %v886, %v1063
    %v1065 = vpop.f32.mrb[0].mxu0
    %v1066 = vpop.f32.mrb[0].mxu0
    %v1067 = vadd.f32 %v886, %v1066
    %v1068 = vpop.f32.mrb[0].mxu0
    %1069 = vmatprep.mubr.bf16.mxu0 0
    %1070 = vmatmul.mubr.bf16.gmra.mrb[0].mxu0 %v917
    %v1071 = vpop.f32.mrb[0].mxu0
    %v1072 = vadd.f32 %v886, %v1071
    %v1073 = vpop.f32.mrb[0].mxu0
    %v1074 = vpop.f32.mrb[0].mxu0
    %v1075 = vadd.f32 %v886, %v1074
    %v1076 = vpop.f32.mrb[0].mxu0
    %1077 = vmatprep.mubr.bf16.mxu0 0
    %1078 = vmatmul.mubr.bf16.gmra.mrb[0].mxu0 %v920
    %v1079 = vpop.f32.mrb[0].mxu0
    %v1080 = vadd.f32 %v886, %v1079
    %v1081 = vpop.f32.mrb[0].mxu0
    %v1082 = vpop.f32.mrb[0].mxu0
    %v1083 = vadd.f32 %v886, %v1082
    %v1084 = vpop.f32.mrb[0].mxu0
    %1085 = vmatprep.mubr.bf16.mxu0 0
    %1086 = vmatmul.mubr.bf16.gmra.mrb[0].mxu0 %v923
    %v1087 = vpop.f32.mrb[0].mxu0
    %v1088 = vadd.f32 %v886, %v1087
    %v1089 = vpop.f32.mrb[0].mxu0
    %v1090 = vpop.f32.mrb[0].mxu0
    %v1091 = vadd.f32 %v886, %v1090
    %v1092 = vpop.f32.mrb[0].mxu0
    %1093 = vmatprep.mubr.bf16.mxu0 0
    %1094 = vmatmul.mubr.bf16.gmra.mrb[0].mxu0 %v926
    %v1095 = vpop.f32.mrb[0].mxu0
    %v1096 = vadd.f32 %v886, %v1095
    %v1097 = vpop.f32.mrb[0].mxu0
    %v1098 = vpop.f32.mrb[0].mxu0
    %v1099 = vadd.f32 %v886, %v1098
    %v1100 = vpop.f32.mrb[0].mxu0
    %1101 = vmatprep.mubr.bf16.mxu0 0
    %1102 = vmatmul.mubr.bf16.gmra.mrb[0].mxu0 %v929
    %v1103 = vpop.f32.mrb[0].mxu0
    %v1104 = vadd.f32 %v886, %v1103
    %v1105 = vpop.f32.mrb[0].mxu0
    %v1106 = vpop.f32.mrb[0].mxu0
    %v1107 = vadd.f32 %v886, %v1106
    %v1108 = vpop.f32.mrb[0].mxu0
    %1109 = vmatprep.mubr.bf16.mxu0 0
    %1110 = vmatmul.mubr.bf16.gmra.mrb[0].mxu0 %v932
    %v1111 = vpop.f32.mrb[0].mxu0
    %v1112 = vadd.f32 %v886, %v1111
    %v1113 = vpop.f32.mrb[0].mxu0
    %v1114 = vpop.f32.mrb[0].mxu0
    %v1115 = vadd.f32 %v886, %v1114
    %v1116 = vpop.f32.mrb[0].mxu0
    %1117 = vmatprep.mubr.bf16.mxu0 0
    %1118 = vmatmul.mubr.bf16.gmra.mrb[0].mxu0 %v935
    %v1119 = vpop.f32.mrb[0].mxu0
    %v1120 = vadd.f32 %v886, %v1119
    %v1121 = vpop.f32.mrb[0].mxu0
    %v1122 = vpop.f32.mrb[0].mxu0
    %v1123 = vadd.f32 %v886, %v1122
    %v1124 = vpop.f32.mrb[0].mxu0
    %1125 = vmatprep.mubr.bf16.mxu0 0
    %1126 = vmatmul.mubr.bf16.gmra.mrb[0].mxu0 %v938
    %v1127 = vpop.f32.mrb[0].mxu0
    %v1128 = vadd.f32 %v886, %v1127
    %v1129 = vpop.f32.mrb[0].mxu0
    %v1130 = vpop.f32.mrb[0].mxu0
    %v1131 = vadd.f32 %v886, %v1130
    %v1132 = vpop.f32.mrb[0].mxu0
    %1133 = vmatprep.mubr.bf16.mxu0 0
    %1134 = vmatmul.mubr.bf16.gmra.mrb[0].mxu0 %v941
    %v1135 = vpop.f32.mrb[0].mxu0
    %v1136 = vadd.f32 %v886, %v1135
    %v1137 = vpop.f32.mrb[0].mxu0
    %v1138 = vpop.f32.mrb[0].mxu0
    %v1139 = vadd.f32 %v886, %v1138
    %v1140 = vpop.f32.mrb[0].mxu0
    %1141 = vmatprep.mubr.bf16.mxu0 0
    %1142 = vmatmul.mubr.bf16.gmra.mrb[0].mxu0 %v944
    %v1143 = vpop.f32.mrb[0].mxu0
    %v1144 = vadd.f32 %v886, %v1143
    %v1145 = vpop.f32.mrb[0].mxu0
    %v1146 = vpop.f32.mrb[0].mxu0
    %v1147 = vadd.f32 %v886, %v1146
    %v1148 = vpop.f32.mrb[0].mxu0
    %1149 = vmatprep.mubr.bf16.mxu0 0
    %1150 = vmatmul.mubr.bf16.gmra.mrb[0].mxu0 %v947
    %v1151 = vpop.f32.mrb[0].mxu0
    %v1152 = vadd.f32 %v886, %v1151
    %v1153 = vpop.f32.mrb[0].mxu0
    %v1154 = vpop.f32.mrb[0].mxu0
    %v1155 = vadd.f32 %v886, %v1154
    %v1156 = vpop.f32.mrb[0].mxu0
    %1157 = vmatprep.mubr.bf16.mxu0 0
    %1158 = vmatmul.mubr.bf16.gmra.mrb[0].mxu0 %v950
    %v1159 = vpop.f32.mrb[0].mxu0
    %v1160 = vadd.f32 %v886, %v1159
    %v1161 = vpop.f32.mrb[0].mxu0
    %v1162 = vpop.f32.mrb[0].mxu0
    %v1163 = vadd.f32 %v886, %v1162
    %v1164 = vpop.f32.mrb[0].mxu0
    %1165 = vmatprep.mubr.bf16.mxu0 0
    %1166 = vmatmul.mubr.bf16.gmra.mrb[0].mxu0 %v953
    %v1167 = vpop.f32.mrb[0].mxu0
    %v1168 = vadd.f32 %v886, %v1167
    %v1169 = vpop.f32.mrb[0].mxu0
    %v1170 = vpop.f32.mrb[0].mxu0
    %v1171 = vadd.f32 %v886, %v1170
    %v1172 = vpop.f32.mrb[0].mxu0
    %1173 = vmatprep.mubr.bf16.mxu0 0
    %1174 = vmatmul.mubr.bf16.gmra.mrb[0].mxu0 %v956
    %v1175 = vpop.f32.mrb[0].mxu0
    %v1176 = vadd.f32 %v886, %v1175
    %v1177 = vpop.f32.mrb[0].mxu0
    %v1178 = vpop.f32.mrb[0].mxu0
    %v1179 = vadd.f32 %v886, %v1178
    %v1180 = vpop.f32.mrb[0].mxu0
    %1181 = vmatprep.mubr.bf16.mxu0 0
    %1182 = vmatmul.mubr.bf16.gmra.mrb[0].mxu0 %v959
    %v1183 = vpop.f32.mrb[0].mxu0
    %v1184 = vadd.f32 %v886, %v1183
    %v1185 = vpop.f32.mrb[0].mxu0
    %v1186 = vpop.f32.mrb[0].mxu0
    %v1187 = vadd.f32 %v886, %v1186
    %v1188 = vpop.f32.mrb[0].mxu0
    %1189 = vmatprep.mubr.bf16.mxu0 0
    %1190 = vmatmul.mubr.bf16.gmra.mrb[0].mxu0 %v962
    %v1191 = vpop.f32.mrb[0].mxu0
    %v1192 = vadd.f32 %v886, %v1191
    %v1193 = vpop.f32.mrb[0].mxu0
    %v1194 = vpop.f32.mrb[0].mxu0
    %v1195 = vadd.f32 %v886, %v1194
    %v1196 = vpop.f32.mrb[0].mxu0
    %1197 = vmatprep.mubr.bf16.mxu0 0
    %1198 = vmatmul.mubr.bf16.gmra.mrb[0].mxu0 %v965
    %v1199 = vpop.f32.mrb[0].mxu0
    %v1200 = vadd.f32 %v886, %v1199
    %v1201 = vpop.f32.mrb[0].mxu0
    %v1202 = vpop.f32.mrb[0].mxu0
    %v1203 = vadd.f32 %v886, %v1202
    %v1204 = vpop.f32.mrb[0].mxu0
    %1205 = vmatprep.mubr.bf16.mxu0 0
    %1206 = vmatmul.mubr.bf16.gmra.mrb[0].mxu0 %v968
    %v1207 = vpop.f32.mrb[0].mxu0
    %v1208 = vadd.f32 %v886, %v1207
    %v1209 = vpop.f32.mrb[0].mxu0
    %v1210 = vpop.f32.mrb[0].mxu0
    %v1211 = vadd.f32 %v886, %v1210
    %v1212 = vpop.f32.mrb[0].mxu0
    %1213 = vmatprep.mubr.bf16.mxu0 0
    %1214 = vmatmul.mubr.bf16.gmra.mrb[0].mxu0 %v971
    %v1215 = vpop.f32.mrb[0].mxu0
    %v1216 = vadd.f32 %v886, %v1215
    %v1217 = vpop.f32.mrb[0].mxu0
    %v1218 = vpop.f32.mrb[0].mxu0
    %v1219 = vadd.f32 %v886, %v1218
    %v1220 = vpop.f32.mrb[0].mxu0
    %1221 = vmatprep.mubr.bf16.mxu0 0
    %1222 = vmatmul.mubr.bf16.gmra.mrb[0].mxu0 %v974
    %v1223 = vpop.f32.mrb[0].mxu0
    %v1224 = vadd.f32 %v886, %v1223
    %v1225 = vpop.f32.mrb[0].mxu0
    %v1226 = vpop.f32.mrb[0].mxu0
    %v1227 = vadd.f32 %v886, %v1226
    %v1228 = vpop.f32.mrb[0].mxu0
    %1229 = vmatprep.mubr.bf16.mxu0 0
    %1230 = vmatmul.mubr.bf16.gmra.mrb[0].mxu0 %v977
    %v1231 = vpop.f32.mrb[0].mxu0
    %v1232 = vadd.f32 %v886, %v1231
    %v1233 = vpop.f32.mrb[0].mxu0
    %v1234 = vpop.f32.mrb[0].mxu0
    %v1235 = vadd.f32 %v886, %v1234
    %v1236 = vpop.f32.mrb[0].mxu0
    %1237 = vmatprep.mubr.bf16.mxu0 0
    %1238 = vmatmul.mubr.bf16.gmra.mrb[0].mxu0 %v980
    %v1239 = vpop.f32.mrb[0].mxu0
    %v1240 = vadd.f32 %v886, %v1239
    %v1241 = vpop.f32.mrb[0].mxu0
    %v1242 = vpop.f32.mrb[0].mxu0
    %v1243 = vadd.f32 %v886, %v1242
    %v1244 = vpop.f32.mrb[0].mxu0
    %1245 = vmatprep.mubr.bf16.mxu0 0
    %1246 = vmatmul.mubr.bf16.gmra.mrb[0].mxu0 %v983
    %v1247 = vpop.f32.mrb[0].mxu0
    %v1248 = vadd.f32 %v886, %v1247
    %v1249 = vpop.f32.mrb[0].mxu0
    %v1250 = vpop.f32.mrb[0].mxu0
    %v1251 = vadd.f32 %v886, %v1250
    %v1252 = vpop.f32.mrb[0].mxu0
    %1253 = vmatprep.mubr.bf16.mxu0 0
    %1254 = vmatmul.mubr.bf16.gmra.mrb[0].mxu0 %v986
    %v1255 = vpop.f32.mrb[0].mxu0
    %v1256 = vadd.f32 %v886, %v1255
    %v1257 = vpop.f32.mrb[0].mxu0
    %v1258 = vpop.f32.mrb[0].mxu0
    %v1259 = vadd.f32 %v886, %v1258
    %v1260 = vpop.f32.mrb[0].mxu0
    %1261 = vmatprep.mubr.bf16.mxu0 0
    %1262 = vmatmul.mubr.bf16.gmra.mrb[0].mxu0 %v989
    %v1263 = vpop.f32.mrb[0].mxu0
    %v1264 = vadd.f32 %v886, %v1263
    %v1265 = vpop.f32.mrb[0].mxu0
    %v1266 = vpop.f32.mrb[0].mxu0
    %v1267 = vadd.f32 %v886, %v1266
    %v1268 = vpop.f32.mrb[0].mxu0
    %1269 = vmatprep.mubr.bf16.mxu0 0
    %1270 = vmatmul.mubr.bf16.gmra.mrb[0].mxu0 %v992
    %v1271 = vpop.f32.mrb[0].mxu0
    %v1272 = vadd.f32 %v886, %v1271
    %v1273 = vpop.f32.mrb[0].mxu0
    %v1274 = vpop.f32.mrb[0].mxu0
    %v1275 = vadd.f32 %v886, %v1274
    %v1276 = vpop.f32.mrb[0].mxu0
    %1277 = vmatprep.mubr.bf16.mxu0 0
    %1278 = vmatmul.mubr.bf16.gmra.mrb[0].mxu0 %v995
    %v1279 = vpop.f32.mrb[0].mxu0
    %v1280 = vadd.f32 %v886, %v1279
    %v1281 = vpop.f32.mrb[0].mxu0
    %v1282 = vpop.f32.mrb[0].mxu0
    %v1283 = vadd.f32 %v886, %v1282
    %v1284 = vpop.f32.mrb[0].mxu0
    %1285 = vdwg.mxu0
    %vm1286 = vcmp.ge.f32.partialorder %v1032, 0.0
    %vm1287 = vcmp.ge.f32.partialorder %v1035, 0.0
    %vm1288 = vcmp.ge.f32.partialorder %v1040, 0.0
    %vm1289 = vcmp.ge.f32.partialorder %v1043, 0.0
    %vm1290 = vcmp.ge.f32.partialorder %v1048, 0.0
    %vm1291 = vcmp.ge.f32.partialorder %v1051, 0.0
    %vm1292 = vcmp.ge.f32.partialorder %v1056, 0.0
    %vm1293 = vcmp.ge.f32.partialorder %v1059, 0.0
    %vm1294 = vcmp.ge.f32.partialorder %v1064, 0.0
    %vm1295 = vcmp.ge.f32.partialorder %v1067, 0.0
    %vm1296 = vcmp.ge.f32.partialorder %v1072, 0.0
    %vm1297 = vcmp.ge.f32.partialorder %v1075, 0.0
    %vm1298 = vcmp.ge.f32.partialorder %v1080, 0.0
    %vm1299 = vcmp.ge.f32.partialorder %v1083, 0.0
    %vm1300 = vcmp.ge.f32.partialorder %v1088, 0.0
    %vm1301 = vcmp.ge.f32.partialorder %v1091, 0.0
    %vm1302 = vcmp.ge.f32.partialorder %v1096, 0.0
    %vm1303 = vcmp.ge.f32.partialorder %v1099, 0.0
    %vm1304 = vcmp.ge.f32.partialorder %v1104, 0.0
    %vm1305 = vcmp.ge.f32.partialorder %v1107, 0.0
    %vm1306 = vcmp.ge.f32.partialorder %v1112, 0.0
    %vm1307 = vcmp.ge.f32.partialorder %v1115, 0.0
    %vm1308 = vcmp.ge.f32.partialorder %v1120, 0.0
    %vm1309 = vcmp.ge.f32.partialorder %v1123, 0.0
    %vm1310 = vcmp.ge.f32.partialorder %v1128, 0.0
    %vm1311 = vcmp.ge.f32.partialorder %v1131, 0.0
    %vm1312 = vcmp.ge.f32.partialorder %v1136, 0.0
    %vm1313 = vcmp.ge.f32.partialorder %v1139, 0.0
    %vm1314 = vcmp.ge.f32.partialorder %v1144, 0.0
    %vm1315 = vcmp.ge.f32.partialorder %v1147, 0.0
    %vm1316 = vcmp.ge.f32.partialorder %v1152, 0.0
    %vm1317 = vcmp.ge.f32.partialorder %v1155, 0.0
    %vm1318 = vcmp.ge.f32.partialorder %v1160, 0.0
    %vm1319 = vcmp.ge.f32.partialorder %v1163, 0.0
    %vm1320 = vcmp.ge.f32.partialorder %v1168, 0.0
    %vm1321 = vcmp.ge.f32.partialorder %v1171, 0.0
    %vm1322 = vcmp.ge.f32.partialorder %v1176, 0.0
    %vm1323 = vcmp.ge.f32.partialorder %v1179, 0.0
    %vm1324 = vcmp.ge.f32.partialorder %v1184, 0.0
    %vm1325 = vcmp.ge.f32.partialorder %v1187, 0.0
    %vm1326 = vcmp.ge.f32.partialorder %v1192, 0.0
    %vm1327 = vcmp.ge.f32.partialorder %v1195, 0.0
    %vm1328 = vcmp.ge.f32.partialorder %v1200, 0.0
    %vm1329 = vcmp.ge.f32.partialorder %v1203, 0.0
    %vm1330 = vcmp.ge.f32.partialorder %v1208, 0.0
    %vm1331 = vcmp.ge.f32.partialorder %v1211, 0.0
    %vm1332 = vcmp.ge.f32.partialorder %v1216, 0.0
    %vm1333 = vcmp.ge.f32.partialorder %v1219, 0.0
    %vm1334 = vcmp.ge.f32.partialorder %v1224, 0.0
    %vm1335 = vcmp.ge.f32.partialorder %v1227, 0.0
    %vm1336 = vcmp.ge.f32.partialorder %v1232, 0.0
    %vm1337 = vcmp.ge.f32.partialorder %v1235, 0.0
    %vm1338 = vcmp.ge.f32.partialorder %v1240, 0.0
    %vm1339 = vcmp.ge.f32.partialorder %v1243, 0.0
    %vm1340 = vcmp.ge.f32.partialorder %v1248, 0.0
    %vm1341 = vcmp.ge.f32.partialorder %v1251, 0.0
    %vm1342 = vcmp.ge.f32.partialorder %v1256, 0.0
    %vm1343 = vcmp.ge.f32.partialorder %v1259, 0.0
    %vm1344 = vcmp.ge.f32.partialorder %v1264, 0.0
    %vm1345 = vcmp.ge.f32.partialorder %v1267, 0.0
    %vm1346 = vcmp.ge.f32.partialorder %v1272, 0.0
    %vm1347 = vcmp.ge.f32.partialorder %v1275, 0.0
    %vm1348 = vcmp.ge.f32.partialorder %v1280, 0.0
    %vm1349 = vcmp.ge.f32.partialorder %v1283, 0.0
    %v1350 = vmul.f32 %v1032, 0.2
    %v1351 = vmul.f32 %v1035, 0.2
    %v1352 = vmul.f32 %v1040, 0.2
    %v1353 = vmul.f32 %v1043, 0.2
    %v1354 = vmul.f32 %v1048, 0.2
    %v1355 = vmul.f32 %v1051, 0.2
    %v1356 = vmul.f32 %v1056, 0.2
    %v1357 = vmul.f32 %v1059, 0.2
    %v1358 = vmul.f32 %v1064, 0.2
    %v1359 = vmul.f32 %v1067, 0.2
    %v1360 = vmul.f32 %v1072, 0.2
    %v1361 = vmul.f32 %v1075, 0.2
    %v1362 = vmul.f32 %v1080, 0.2
    %v1363 = vmul.f32 %v1083, 0.2
    %v1364 = vmul.f32 %v1088, 0.2
    %v1365 = vmul.f32 %v1091, 0.2
    %v1366 = vmul.f32 %v1096, 0.2
    %v1367 = vmul.f32 %v1099, 0.2
    %v1368 = vmul.f32 %v1104, 0.2
    %v1369 = vmul.f32 %v1107, 0.2
    %v1370 = vmul.f32 %v1112, 0.2
    %v1371 = vmul.f32 %v1115, 0.2
    %v1372 = vmul.f32 %v1120, 0.2
    %v1373 = vmul.f32 %v1123, 0.2
    %v1374 = vmul.f32 %v1128, 0.2
    %v1375 = vmul.f32 %v1131, 0.2
    %v1376 = vmul.f32 %v1136, 0.2
    %v1377 = vmul.f32 %v1139, 0.2
    %v1378 = vmul.f32 %v1144, 0.2
    %v1379 = vmul.f32 %v1147, 0.2
    %v1380 = vmul.f32 %v1152, 0.2
    %v1381 = vmul.f32 %v1155, 0.2
    %v1382 = vmul.f32 %v1160, 0.2
    %v1383 = vmul.f32 %v1163, 0.2
    %v1384 = vmul.f32 %v1168, 0.2
    %v1385 = vmul.f32 %v1171, 0.2
    %v1386 = vmul.f32 %v1176, 0.2
    %v1387 = vmul.f32 %v1179, 0.2
    %v1388 = vmul.f32 %v1184, 0.2
    %v1389 = vmul.f32 %v1187, 0.2
    %v1390 = vmul.f32 %v1192, 0.2
    %v1391 = vmul.f32 %v1195, 0.2
    %v1392 = vmul.f32 %v1200, 0.2
    %v1393 = vmul.f32 %v1203, 0.2
    %v1394 = vmul.f32 %v1208, 0.2
    %v1395 = vmul.f32 %v1211, 0.2
    %v1396 = vmul.f32 %v1216, 0.2
    %v1397 = vmul.f32 %v1219, 0.2
    %v1398 = vmul.f32 %v1224, 0.2
    %v1399 = vmul.f32 %v1227, 0.2
    %v1400 = vmul.f32 %v1232, 0.2
    %v1401 = vmul.f32 %v1235, 0.2
    %v1402 = vmul.f32 %v1240, 0.2
    %v1403 = vmul.f32 %v1243, 0.2
    %v1404 = vmul.f32 %v1248, 0.2
    %v1405 = vmul.f32 %v1251, 0.2
    %v1406 = vmul.f32 %v1256, 0.2
    %v1407 = vmul.f32 %v1259, 0.2
    %v1408 = vmul.f32 %v1264, 0.2
    %v1409 = vmul.f32 %v1267, 0.2
    %v1410 = vmul.f32 %v1272, 0.2
    %v1411 = vmul.f32 %v1275, 0.2
    %v1412 = vmul.f32 %v1280, 0.2
    %v1413 = vmul.f32 %v1283, 0.2
    %v1414 = vsel %vm1286, %v1032, %v1350
    %v1415 = vsel %vm1287, %v1035, %v1351
    %v1416 = vsel %vm1288, %v1040, %v1352
    %v1417 = vsel %vm1289, %v1043, %v1353
    %v1418 = vsel %vm1290, %v1048, %v1354
    %v1419 = vsel %vm1291, %v1051, %v1355
    %v1420 = vsel %vm1292, %v1056, %v1356
    %v1421 = vsel %vm1293, %v1059, %v1357
    %v1422 = vsel %vm1294, %v1064, %v1358
    %v1423 = vsel %vm1295, %v1067, %v1359
    %v1424 = vsel %vm1296, %v1072, %v1360
    %v1425 = vsel %vm1297, %v1075, %v1361
    %v1426 = vsel %vm1298, %v1080, %v1362
    %v1427 = vsel %vm1299, %v1083, %v1363
    %v1428 = vsel %vm1300, %v1088, %v1364
    %v1429 = vsel %vm1301, %v1091, %v1365
    %v1430 = vsel %vm1302, %v1096, %v1366
    %v1431 = vsel %vm1303, %v1099, %v1367
    %v1432 = vsel %vm1304, %v1104, %v1368
    %v1433 = vsel %vm1305, %v1107, %v1369
    %v1434 = vsel %vm1306, %v1112, %v1370
    %v1435 = vsel %vm1307, %v1115, %v1371
    %v1436 = vsel %vm1308, %v1120, %v1372
    %v1437 = vsel %vm1309, %v1123, %v1373
    %v1438 = vsel %vm1310, %v1128, %v1374
    %v1439 = vsel %vm1311, %v1131, %v1375
    %v1440 = vsel %vm1312, %v1136, %v1376
    %v1441 = vsel %vm1313, %v1139, %v1377
    %v1442 = vsel %vm1314, %v1144, %v1378
    %v1443 = vsel %vm1315, %v1147, %v1379
    %v1444 = vsel %vm1316, %v1152, %v1380
    %v1445 = vsel %vm1317, %v1155, %v1381
    %v1446 = vsel %vm1318, %v1160, %v1382
    %v1447 = vsel %vm1319, %v1163, %v1383
    %v1448 = vsel %vm1320, %v1168, %v1384
    %v1449 = vsel %vm1321, %v1171, %v1385
    %v1450 = vsel %vm1322, %v1176, %v1386
    %v1451 = vsel %vm1323, %v1179, %v1387
    %v1452 = vsel %vm1324, %v1184, %v1388
    %v1453 = vsel %vm1325, %v1187, %v1389
    %v1454 = vsel %vm1326, %v1192, %v1390
    %v1455 = vsel %vm1327, %v1195, %v1391
    %v1456 = vsel %vm1328, %v1200, %v1392
    %v1457 = vsel %vm1329, %v1203, %v1393
    %v1458 = vsel %vm1330, %v1208, %v1394
    %v1459 = vsel %vm1331, %v1211, %v1395
    %v1460 = vsel %vm1332, %v1216, %v1396
    %v1461 = vsel %vm1333, %v1219, %v1397
    %v1462 = vsel %vm1334, %v1224, %v1398
    %v1463 = vsel %vm1335, %v1227, %v1399
    %v1464 = vsel %vm1336, %v1232, %v1400
    %v1465 = vsel %vm1337, %v1235, %v1401
    %v1466 = vsel %vm1338, %v1240, %v1402
    %v1467 = vsel %vm1339, %v1243, %v1403
    %v1468 = vsel %vm1340, %v1248, %v1404
    %v1469 = vsel %vm1341, %v1251, %v1405
    %v1470 = vsel %vm1342, %v1256, %v1406
    %v1471 = vsel %vm1343, %v1259, %v1407
    %v1472 = vsel %vm1344, %v1264, %v1408
    %v1473 = vsel %vm1345, %v1267, %v1409
    %v1474 = vsel %vm1346, %v1272, %v1410
    %v1475 = vsel %vm1347, %v1275, %v1411
    %v1476 = vsel %vm1348, %v1280, %v1412
    %v1477 = vsel %vm1349, %v1283, %v1413
    %v1478 = vld [vmem:[%s5] sm:$0xf]
    %v1479 = vld [vmem:[%s5 + $0x4] sm:$0xf]
    %v1480 = vld [vmem:[%s5 + $0x8] sm:$0xf]
    %v1481 = vld [vmem:[%s5 + $0xc] sm:$0xf]
    %v1482 = vld [vmem:[%s6] sm:$0x1]
    %v1483 = vpack.c.bf16 %v1415, %v1414
    %v1484 = vpack.c.bf16 %v1417, %v1416
    %v1485 = vpack.c.bf16 %v1419, %v1418
    %v1486 = vpack.c.bf16 %v1421, %v1420
    %v1487 = vpack.c.bf16 %v1423, %v1422
    %v1488 = vpack.c.bf16 %v1425, %v1424
    %v1489 = vpack.c.bf16 %v1427, %v1426
    %v1490 = vpack.c.bf16 %v1429, %v1428
    %v1491 = vpack.c.bf16 %v1431, %v1430
    %v1492 = vpack.c.bf16 %v1433, %v1432
    %v1493 = vpack.c.bf16 %v1435, %v1434
    %v1494 = vpack.c.bf16 %v1437, %v1436
    %v1495 = vpack.c.bf16 %v1439, %v1438
    %v1496 = vpack.c.bf16 %v1441, %v1440
    %v1497 = vpack.c.bf16 %v1443, %v1442
    %v1498 = vpack.c.bf16 %v1445, %v1444
    %v1499 = vpack.c.bf16 %v1447, %v1446
    %v1500 = vpack.c.bf16 %v1449, %v1448
    %v1501 = vpack.c.bf16 %v1451, %v1450
    %v1502 = vpack.c.bf16 %v1453, %v1452
    %v1503 = vpack.c.bf16 %v1455, %v1454
    %v1504 = vpack.c.bf16 %v1457, %v1456
    %v1505 = vpack.c.bf16 %v1459, %v1458
    %v1506 = vpack.c.bf16 %v1461, %v1460
    %v1507 = vpack.c.bf16 %v1463, %v1462
    %v1508 = vpack.c.bf16 %v1465, %v1464
    %v1509 = vpack.c.bf16 %v1467, %v1466
    %v1510 = vpack.c.bf16 %v1469, %v1468
    %v1511 = vpack.c.bf16 %v1471, %v1470
    %v1512 = vpack.c.bf16 %v1473, %v1472
    %v1513 = vpack.c.bf16 %v1475, %v1474
    %v1514 = vpack.c.bf16 %v1477, %v1476
    %v1516 = vlaneseq
    %v1517 = vshrl.u32 %v1516, 7
    %v1518 = vsub.s32 0, %v1517
    %v1519 = vrot.slane %v1482, %v1518
    %v1525 = vunpack.c.l.b16 %v1478
    %v1526 = vunpack.c.l.b16 %v1479
    %v1527 = vunpack.c.l.b16 %v1480
    %v1528 = vunpack.c.l.b16 %v1481
    %v1529 = vpack.c.b16 %v1526, %v1525
    %v1530 = vpack.c.b16 %v1528, %v1527
    %v1534 = vsel %vm900, %v1483, 0
    %v1537 = vsel %vm900, %v1484, 0
    %v1540 = vsel %vm900, %v1485, 0
    %v1543 = vsel %vm900, %v1486, 0
    %v1546 = vsel %vm900, %v1487, 0
    %v1549 = vsel %vm900, %v1488, 0
    %v1552 = vsel %vm900, %v1489, 0
    %v1555 = vsel %vm900, %v1490, 0
    %v1558 = vsel %vm900, %v1491, 0
    %v1561 = vsel %vm900, %v1492, 0
    %v1564 = vsel %vm900, %v1493, 0
    %v1567 = vsel %vm900, %v1494, 0
    %v1570 = vsel %vm900, %v1495, 0
    %v1573 = vsel %vm900, %v1496, 0
    %v1576 = vsel %vm900, %v1497, 0
    %v1579 = vsel %vm900, %v1498, 0
    %v1582 = vsel %vm900, %v1499, 0
    %v1585 = vsel %vm900, %v1500, 0
    %v1588 = vsel %vm900, %v1501, 0
    %v1591 = vsel %vm900, %v1502, 0
    %v1594 = vsel %vm900, %v1503, 0
    %v1597 = vsel %vm900, %v1504, 0
    %v1600 = vsel %vm900, %v1505, 0
    %v1603 = vsel %vm900, %v1506, 0
    %v1606 = vsel %vm900, %v1507, 0
    %v1609 = vsel %vm900, %v1508, 0
    %v1612 = vsel %vm900, %v1509, 0
    %v1615 = vsel %vm900, %v1510, 0
    %v1618 = vsel %vm900, %v1511, 0
    %v1621 = vsel %vm900, %v1512, 0
    %v1624 = vsel %vm900, %v1513, 0
    %v1627 = vsel %vm900, %v1514, 0
    %1629 = vmatprep.subr.bf16.mxu0 0
    %1630 = vmatpush1.bf16.msra.mxu0 %v1529
    %1631 = vmatprep.subr.bf16.mxu0 0
    %1632 = vmatpush1.bf16.msra.mxu0 %v1530
    %1633 = vmatprep.subr.bf16.mxu0 0
    %1634 = vmatpush1.bf16.msra.mxu0 0
    %1635 = vmatprep.subr.bf16.mxu0 0
    %1636 = vmatpush1.bf16.msra.mxu0 0
    %1637 = vmatprep.subr.bf16.mxu0 0
    %1638 = vmatpush1.bf16.msra.mxu0 0
    %1639 = vmatprep.subr.bf16.mxu0 0
    %1640 = vmatpush1.bf16.msra.mxu0 0
    %1641 = vmatprep.subr.bf16.mxu0 0
    %1642 = vmatpush1.bf16.msra.mxu0 0
    %1643 = vmatprep.subr.bf16.mxu0 0
    %1644 = vmatpush1.bf16.msra.mxu0 0
    %1645 = vmatprep.subr.bf16.mxu0 0
    %1646 = vmatpush1.bf16.msra.mxu0 0
    %1647 = vmatprep.subr.bf16.mxu0 0
    %1648 = vmatpush1.bf16.msra.mxu0 0
    %1649 = vmatprep.subr.bf16.mxu0 0
    %1650 = vmatpush1.bf16.msra.mxu0 0
    %1651 = vmatprep.subr.bf16.mxu0 0
    %1652 = vmatpush1.bf16.msra.mxu0 0
    %1653 = vmatprep.subr.bf16.mxu0 0
    %1654 = vmatpush1.bf16.msra.mxu0 0
    %1655 = vmatprep.subr.bf16.mxu0 0
    %1656 = vmatpush1.bf16.msra.mxu0 0
    %1657 = vmatprep.subr.bf16.mxu0 0
    %1658 = vmatpush1.bf16.msra.mxu0 0
    %1659 = vmatprep.subr.bf16.mxu0 0
    %1660 = vmatpush1.bf16.msra.mxu0 0
    %1661 = vmatprep.mubr.bf16.mxu0 0
    %1662 = vmatmul.mubr.bf16.gmra.mrb[0].mxu0 %v1534
    %v1663 = vpop.f32.mrb[0].mxu0
    %v1664 = vadd.f32 %v1519, %v1663
    %v1665 = vpop.f32.mrb[0].mxu0
    %v1666 = vpop.f32.mrb[0].mxu0
    %v1667 = vadd.f32 %v1519, %v1666
    %v1668 = vpop.f32.mrb[0].mxu0
    %1669 = vmatprep.mubr.bf16.mxu0 0
    %1670 = vmatmul.mubr.bf16.gmra.mrb[0].mxu0 %v1537
    %v1671 = vpop.f32.mrb[0].mxu0
    %v1672 = vadd.f32 %v1519, %v1671
    %v1673 = vpop.f32.mrb[0].mxu0
    %v1674 = vpop.f32.mrb[0].mxu0
    %v1675 = vadd.f32 %v1519, %v1674
    %v1676 = vpop.f32.mrb[0].mxu0
    %1677 = vmatprep.mubr.bf16.mxu0 0
    %1678 = vmatmul.mubr.bf16.gmra.mrb[0].mxu0 %v1540
    %v1679 = vpop.f32.mrb[0].mxu0
    %v1680 = vadd.f32 %v1519, %v1679
    %v1681 = vpop.f32.mrb[0].mxu0
    %v1682 = vpop.f32.mrb[0].mxu0
    %v1683 = vadd.f32 %v1519, %v1682
    %v1684 = vpop.f32.mrb[0].mxu0
    %1685 = vmatprep.mubr.bf16.mxu0 0
    %1686 = vmatmul.mubr.bf16.gmra.mrb[0].mxu0 %v1543
    %v1687 = vpop.f32.mrb[0].mxu0
    %v1688 = vadd.f32 %v1519, %v1687
    %v1689 = vpop.f32.mrb[0].mxu0
    %v1690 = vpop.f32.mrb[0].mxu0
    %v1691 = vadd.f32 %v1519, %v1690
    %v1692 = vpop.f32.mrb[0].mxu0
    %1693 = vmatprep.mubr.bf16.mxu0 0
    %1694 = vmatmul.mubr.bf16.gmra.mrb[0].mxu0 %v1546
    %v1695 = vpop.f32.mrb[0].mxu0
    %v1696 = vadd.f32 %v1519, %v1695
    %v1697 = vpop.f32.mrb[0].mxu0
    %v1698 = vpop.f32.mrb[0].mxu0
    %v1699 = vadd.f32 %v1519, %v1698
    %v1700 = vpop.f32.mrb[0].mxu0
    %1701 = vmatprep.mubr.bf16.mxu0 0
    %1702 = vmatmul.mubr.bf16.gmra.mrb[0].mxu0 %v1549
    %v1703 = vpop.f32.mrb[0].mxu0
    %v1704 = vadd.f32 %v1519, %v1703
    %v1705 = vpop.f32.mrb[0].mxu0
    %v1706 = vpop.f32.mrb[0].mxu0
    %v1707 = vadd.f32 %v1519, %v1706
    %v1708 = vpop.f32.mrb[0].mxu0
    %1709 = vmatprep.mubr.bf16.mxu0 0
    %1710 = vmatmul.mubr.bf16.gmra.mrb[0].mxu0 %v1552
    %v1711 = vpop.f32.mrb[0].mxu0
    %v1712 = vadd.f32 %v1519, %v1711
    %v1713 = vpop.f32.mrb[0].mxu0
    %v1714 = vpop.f32.mrb[0].mxu0
    %v1715 = vadd.f32 %v1519, %v1714
    %v1716 = vpop.f32.mrb[0].mxu0
    %1717 = vmatprep.mubr.bf16.mxu0 0
    %1718 = vmatmul.mubr.bf16.gmra.mrb[0].mxu0 %v1555
    %v1719 = vpop.f32.mrb[0].mxu0
    %v1720 = vadd.f32 %v1519, %v1719
    %v1721 = vpop.f32.mrb[0].mxu0
    %v1722 = vpop.f32.mrb[0].mxu0
    %v1723 = vadd.f32 %v1519, %v1722
    %v1724 = vpop.f32.mrb[0].mxu0
    %1725 = vmatprep.mubr.bf16.mxu0 0
    %1726 = vmatmul.mubr.bf16.gmra.mrb[0].mxu0 %v1558
    %v1727 = vpop.f32.mrb[0].mxu0
    %v1728 = vadd.f32 %v1519, %v1727
    %v1729 = vpop.f32.mrb[0].mxu0
    %v1730 = vpop.f32.mrb[0].mxu0
    %v1731 = vadd.f32 %v1519, %v1730
    %v1732 = vpop.f32.mrb[0].mxu0
    %1733 = vmatprep.mubr.bf16.mxu0 0
    %1734 = vmatmul.mubr.bf16.gmra.mrb[0].mxu0 %v1561
    %v1735 = vpop.f32.mrb[0].mxu0
    %v1736 = vadd.f32 %v1519, %v1735
    %v1737 = vpop.f32.mrb[0].mxu0
    %v1738 = vpop.f32.mrb[0].mxu0
    %v1739 = vadd.f32 %v1519, %v1738
    %v1740 = vpop.f32.mrb[0].mxu0
    %1741 = vmatprep.mubr.bf16.mxu0 0
    %1742 = vmatmul.mubr.bf16.gmra.mrb[0].mxu0 %v1564
    %v1743 = vpop.f32.mrb[0].mxu0
    %v1744 = vadd.f32 %v1519, %v1743
    %v1745 = vpop.f32.mrb[0].mxu0
    %v1746 = vpop.f32.mrb[0].mxu0
    %v1747 = vadd.f32 %v1519, %v1746
    %v1748 = vpop.f32.mrb[0].mxu0
    %1749 = vmatprep.mubr.bf16.mxu0 0
    %1750 = vmatmul.mubr.bf16.gmra.mrb[0].mxu0 %v1567
    %v1751 = vpop.f32.mrb[0].mxu0
    %v1752 = vadd.f32 %v1519, %v1751
    %v1753 = vpop.f32.mrb[0].mxu0
    %v1754 = vpop.f32.mrb[0].mxu0
    %v1755 = vadd.f32 %v1519, %v1754
    %v1756 = vpop.f32.mrb[0].mxu0
    %1757 = vmatprep.mubr.bf16.mxu0 0
    %1758 = vmatmul.mubr.bf16.gmra.mrb[0].mxu0 %v1570
    %v1759 = vpop.f32.mrb[0].mxu0
    %v1760 = vadd.f32 %v1519, %v1759
    %v1761 = vpop.f32.mrb[0].mxu0
    %v1762 = vpop.f32.mrb[0].mxu0
    %v1763 = vadd.f32 %v1519, %v1762
    %v1764 = vpop.f32.mrb[0].mxu0
    %1765 = vmatprep.mubr.bf16.mxu0 0
    %1766 = vmatmul.mubr.bf16.gmra.mrb[0].mxu0 %v1573
    %v1767 = vpop.f32.mrb[0].mxu0
    %v1768 = vadd.f32 %v1519, %v1767
    %v1769 = vpop.f32.mrb[0].mxu0
    %v1770 = vpop.f32.mrb[0].mxu0
    %v1771 = vadd.f32 %v1519, %v1770
    %v1772 = vpop.f32.mrb[0].mxu0
    %1773 = vmatprep.mubr.bf16.mxu0 0
    %1774 = vmatmul.mubr.bf16.gmra.mrb[0].mxu0 %v1576
    %v1775 = vpop.f32.mrb[0].mxu0
    %v1776 = vadd.f32 %v1519, %v1775
    %v1777 = vpop.f32.mrb[0].mxu0
    %v1778 = vpop.f32.mrb[0].mxu0
    %v1779 = vadd.f32 %v1519, %v1778
    %v1780 = vpop.f32.mrb[0].mxu0
    %1781 = vmatprep.mubr.bf16.mxu0 0
    %1782 = vmatmul.mubr.bf16.gmra.mrb[0].mxu0 %v1579
    %v1783 = vpop.f32.mrb[0].mxu0
    %v1784 = vadd.f32 %v1519, %v1783
    %v1785 = vpop.f32.mrb[0].mxu0
    %v1786 = vpop.f32.mrb[0].mxu0
    %v1787 = vadd.f32 %v1519, %v1786
    %v1788 = vpop.f32.mrb[0].mxu0
    %1789 = vmatprep.mubr.bf16.mxu0 0
    %1790 = vmatmul.mubr.bf16.gmra.mrb[0].mxu0 %v1582
    %v1791 = vpop.f32.mrb[0].mxu0
    %v1792 = vadd.f32 %v1519, %v1791
    %v1793 = vpop.f32.mrb[0].mxu0
    %v1794 = vpop.f32.mrb[0].mxu0
    %v1795 = vadd.f32 %v1519, %v1794
    %v1796 = vpop.f32.mrb[0].mxu0
    %1797 = vmatprep.mubr.bf16.mxu0 0
    %1798 = vmatmul.mubr.bf16.gmra.mrb[0].mxu0 %v1585
    %v1799 = vpop.f32.mrb[0].mxu0
    %v1800 = vadd.f32 %v1519, %v1799
    %v1801 = vpop.f32.mrb[0].mxu0
    %v1802 = vpop.f32.mrb[0].mxu0
    %v1803 = vadd.f32 %v1519, %v1802
    %v1804 = vpop.f32.mrb[0].mxu0
    %1805 = vmatprep.mubr.bf16.mxu0 0
    %1806 = vmatmul.mubr.bf16.gmra.mrb[0].mxu0 %v1588
    %v1807 = vpop.f32.mrb[0].mxu0
    %v1808 = vadd.f32 %v1519, %v1807
    %v1809 = vpop.f32.mrb[0].mxu0
    %v1810 = vpop.f32.mrb[0].mxu0
    %v1811 = vadd.f32 %v1519, %v1810
    %v1812 = vpop.f32.mrb[0].mxu0
    %1813 = vmatprep.mubr.bf16.mxu0 0
    %1814 = vmatmul.mubr.bf16.gmra.mrb[0].mxu0 %v1591
    %v1815 = vpop.f32.mrb[0].mxu0
    %v1816 = vadd.f32 %v1519, %v1815
    %v1817 = vpop.f32.mrb[0].mxu0
    %v1818 = vpop.f32.mrb[0].mxu0
    %v1819 = vadd.f32 %v1519, %v1818
    %v1820 = vpop.f32.mrb[0].mxu0
    %1821 = vmatprep.mubr.bf16.mxu0 0
    %1822 = vmatmul.mubr.bf16.gmra.mrb[0].mxu0 %v1594
    %v1823 = vpop.f32.mrb[0].mxu0
    %v1824 = vadd.f32 %v1519, %v1823
    %v1825 = vpop.f32.mrb[0].mxu0
    %v1826 = vpop.f32.mrb[0].mxu0
    %v1827 = vadd.f32 %v1519, %v1826
    %v1828 = vpop.f32.mrb[0].mxu0
    %1829 = vmatprep.mubr.bf16.mxu0 0
    %1830 = vmatmul.mubr.bf16.gmra.mrb[0].mxu0 %v1597
    %v1831 = vpop.f32.mrb[0].mxu0
    %v1832 = vadd.f32 %v1519, %v1831
    %v1833 = vpop.f32.mrb[0].mxu0
    %v1834 = vpop.f32.mrb[0].mxu0
    %v1835 = vadd.f32 %v1519, %v1834
    %v1836 = vpop.f32.mrb[0].mxu0
    %1837 = vmatprep.mubr.bf16.mxu0 0
    %1838 = vmatmul.mubr.bf16.gmra.mrb[0].mxu0 %v1600
    %v1839 = vpop.f32.mrb[0].mxu0
    %v1840 = vadd.f32 %v1519, %v1839
    %v1841 = vpop.f32.mrb[0].mxu0
    %v1842 = vpop.f32.mrb[0].mxu0
    %v1843 = vadd.f32 %v1519, %v1842
    %v1844 = vpop.f32.mrb[0].mxu0
    %1845 = vmatprep.mubr.bf16.mxu0 0
    %1846 = vmatmul.mubr.bf16.gmra.mrb[0].mxu0 %v1603
    %v1847 = vpop.f32.mrb[0].mxu0
    %v1848 = vadd.f32 %v1519, %v1847
    %v1849 = vpop.f32.mrb[0].mxu0
    %v1850 = vpop.f32.mrb[0].mxu0
    %v1851 = vadd.f32 %v1519, %v1850
    %v1852 = vpop.f32.mrb[0].mxu0
    %1853 = vmatprep.mubr.bf16.mxu0 0
    %1854 = vmatmul.mubr.bf16.gmra.mrb[0].mxu0 %v1606
    %v1855 = vpop.f32.mrb[0].mxu0
    %v1856 = vadd.f32 %v1519, %v1855
    %v1857 = vpop.f32.mrb[0].mxu0
    %v1858 = vpop.f32.mrb[0].mxu0
    %v1859 = vadd.f32 %v1519, %v1858
    %v1860 = vpop.f32.mrb[0].mxu0
    %1861 = vmatprep.mubr.bf16.mxu0 0
    %1862 = vmatmul.mubr.bf16.gmra.mrb[0].mxu0 %v1609
    %v1863 = vpop.f32.mrb[0].mxu0
    %v1864 = vadd.f32 %v1519, %v1863
    %v1865 = vpop.f32.mrb[0].mxu0
    %v1866 = vpop.f32.mrb[0].mxu0
    %v1867 = vadd.f32 %v1519, %v1866
    %v1868 = vpop.f32.mrb[0].mxu0
    %1869 = vmatprep.mubr.bf16.mxu0 0
    %1870 = vmatmul.mubr.bf16.gmra.mrb[0].mxu0 %v1612
    %v1871 = vpop.f32.mrb[0].mxu0
    %v1872 = vadd.f32 %v1519, %v1871
    %v1873 = vpop.f32.mrb[0].mxu0
    %v1874 = vpop.f32.mrb[0].mxu0
    %v1875 = vadd.f32 %v1519, %v1874
    %v1876 = vpop.f32.mrb[0].mxu0
    %1877 = vmatprep.mubr.bf16.mxu0 0
    %1878 = vmatmul.mubr.bf16.gmra.mrb[0].mxu0 %v1615
    %v1879 = vpop.f32.mrb[0].mxu0
    %v1880 = vadd.f32 %v1519, %v1879
    %v1881 = vpop.f32.mrb[0].mxu0
    %v1882 = vpop.f32.mrb[0].mxu0
    %v1883 = vadd.f32 %v1519, %v1882
    %v1884 = vpop.f32.mrb[0].mxu0
    %1885 = vmatprep.mubr.bf16.mxu0 0
    %1886 = vmatmul.mubr.bf16.gmra.mrb[0].mxu0 %v1618
    %v1887 = vpop.f32.mrb[0].mxu0
    %v1888 = vadd.f32 %v1519, %v1887
    %v1889 = vpop.f32.mrb[0].mxu0
    %v1890 = vpop.f32.mrb[0].mxu0
    %v1891 = vadd.f32 %v1519, %v1890
    %v1892 = vpop.f32.mrb[0].mxu0
    %1893 = vmatprep.mubr.bf16.mxu0 0
    %1894 = vmatmul.mubr.bf16.gmra.mrb[0].mxu0 %v1621
    %v1895 = vpop.f32.mrb[0].mxu0
    %v1896 = vadd.f32 %v1519, %v1895
    %v1897 = vpop.f32.mrb[0].mxu0
    %v1898 = vpop.f32.mrb[0].mxu0
    %v1899 = vadd.f32 %v1519, %v1898
    %v1900 = vpop.f32.mrb[0].mxu0
    %1901 = vmatprep.mubr.bf16.mxu0 0
    %1902 = vmatmul.mubr.bf16.gmra.mrb[0].mxu0 %v1624
    %v1903 = vpop.f32.mrb[0].mxu0
    %v1904 = vadd.f32 %v1519, %v1903
    %v1905 = vpop.f32.mrb[0].mxu0
    %v1906 = vpop.f32.mrb[0].mxu0
    %v1907 = vadd.f32 %v1519, %v1906
    %v1908 = vpop.f32.mrb[0].mxu0
    %1909 = vmatprep.mubr.bf16.mxu0 0
    %1910 = vmatmul.mubr.bf16.gmra.mrb[0].mxu0 %v1627
    %v1911 = vpop.f32.mrb[0].mxu0
    %v1912 = vadd.f32 %v1519, %v1911
    %v1913 = vpop.f32.mrb[0].mxu0
    %v1914 = vpop.f32.mrb[0].mxu0
    %v1915 = vadd.f32 %v1519, %v1914
    %v1916 = vpop.f32.mrb[0].mxu0
    %1917 = vdwg.mxu0
    %v1918 = vtanh.pop %v1664
    %v1919 = vtanh.pop %v1667
    %v1920 = vtanh.pop %v1672
    %v1921 = vtanh.pop %v1675
    %v1922 = vtanh.pop %v1680
    %v1923 = vtanh.pop %v1683
    %v1924 = vtanh.pop %v1688
    %v1925 = vtanh.pop %v1691
    %v1926 = vtanh.pop %v1696
    %v1927 = vtanh.pop %v1699
    %v1928 = vtanh.pop %v1704
    %v1929 = vtanh.pop %v1707
    %v1930 = vtanh.pop %v1712
    %v1931 = vtanh.pop %v1715
    %v1932 = vtanh.pop %v1720
    %v1933 = vtanh.pop %v1723
    %v1934 = vtanh.pop %v1728
    %v1935 = vtanh.pop %v1731
    %v1936 = vtanh.pop %v1736
    %v1937 = vtanh.pop %v1739
    %v1938 = vtanh.pop %v1744
    %v1939 = vtanh.pop %v1747
    %v1940 = vtanh.pop %v1752
    %v1941 = vtanh.pop %v1755
    %v1942 = vtanh.pop %v1760
    %v1943 = vtanh.pop %v1763
    %v1944 = vtanh.pop %v1768
    %v1945 = vtanh.pop %v1771
    %v1946 = vtanh.pop %v1776
    %v1947 = vtanh.pop %v1779
    %v1948 = vtanh.pop %v1784
    %v1949 = vtanh.pop %v1787
    %v1950 = vtanh.pop %v1792
    %v1951 = vtanh.pop %v1795
    %v1952 = vtanh.pop %v1800
    %v1953 = vtanh.pop %v1803
    %v1954 = vtanh.pop %v1808
    %v1955 = vtanh.pop %v1811
    %v1956 = vtanh.pop %v1816
    %v1957 = vtanh.pop %v1819
    %v1958 = vtanh.pop %v1824
    %v1959 = vtanh.pop %v1827
    %v1960 = vtanh.pop %v1832
    %v1961 = vtanh.pop %v1835
    %v1962 = vtanh.pop %v1840
    %v1963 = vtanh.pop %v1843
    %v1964 = vtanh.pop %v1848
    %v1965 = vtanh.pop %v1851
    %v1966 = vtanh.pop %v1856
    %v1967 = vtanh.pop %v1859
    %v1968 = vtanh.pop %v1864
    %v1969 = vtanh.pop %v1867
    %v1970 = vtanh.pop %v1872
    %v1971 = vtanh.pop %v1875
    %v1972 = vtanh.pop %v1880
    %v1973 = vtanh.pop %v1883
    %v1974 = vtanh.pop %v1888
    %v1975 = vtanh.pop %v1891
    %v1976 = vtanh.pop %v1896
    %v1977 = vtanh.pop %v1899
    %v1978 = vtanh.pop %v1904
    %v1979 = vtanh.pop %v1907
    %v1980 = vtanh.pop %v1912
    %v1981 = vtanh.pop %v1915
    %1982 = vst [vmem:[#allocation2] sm:$0xff] %v1918
    %1983 = vst [vmem:[#allocation2 + $0x8] sm:$0xff] %v1919
    %1984 = vst [vmem:[#allocation2 + $0x10] sm:$0xff] %v1920
    %1985 = vst [vmem:[#allocation2 + $0x18] sm:$0xff] %v1921
    %1986 = vst [vmem:[#allocation2 + $0x20] sm:$0xff] %v1922
    %1987 = vst [vmem:[#allocation2 + $0x28] sm:$0xff] %v1923
    %1988 = vst [vmem:[#allocation2 + $0x30] sm:$0xff] %v1924
    %1989 = vst [vmem:[#allocation2 + $0x38] sm:$0xff] %v1925
    %1990 = vst [vmem:[#allocation2 + $0x40] sm:$0xff] %v1926
    %1991 = vst [vmem:[#allocation2 + $0x48] sm:$0xff] %v1927
    %1992 = vst [vmem:[#allocation2 + $0x50] sm:$0xff] %v1928
    %1993 = vst [vmem:[#allocation2 + $0x58] sm:$0xff] %v1929
    %1994 = vst [vmem:[#allocation2 + $0x60] sm:$0xff] %v1930
    %1995 = vst [vmem:[#allocation2 + $0x68] sm:$0xff] %v1931
    %1996 = vst [vmem:[#allocation2 + $0x70] sm:$0xff] %v1932
    %1997 = vst [vmem:[#allocation2 + $0x78] sm:$0xff] %v1933
    %1998 = vst [vmem:[#allocation2 + $0x80] sm:$0xff] %v1934
    %1999 = vst [vmem:[#allocation2 + $0x88] sm:$0xff] %v1935
    %2000 = vst [vmem:[#allocation2 + $0x90] sm:$0xff] %v1936
    %2001 = vst [vmem:[#allocation2 + $0x98] sm:$0xff] %v1937
    %2002 = vst [vmem:[#allocation2 + $0xa0] sm:$0xff] %v1938
    %2003 = vst [vmem:[#allocation2 + $0xa8] sm:$0xff] %v1939
    %2004 = vst [vmem:[#allocation2 + $0xb0] sm:$0xff] %v1940
    %2005 = vst [vmem:[#allocation2 + $0xb8] sm:$0xff] %v1941
    %2006 = vst [vmem:[#allocation2 + $0xc0] sm:$0xff] %v1942
    %2007 = vst [vmem:[#allocation2 + $0xc8] sm:$0xff] %v1943
    %2008 = vst [vmem:[#allocation2 + $0xd0] sm:$0xff] %v1944
    %2009 = vst [vmem:[#allocation2 + $0xd8] sm:$0xff] %v1945
    %2010 = vst [vmem:[#allocation2 + $0xe0] sm:$0xff] %v1946
    %2011 = vst [vmem:[#allocation2 + $0xe8] sm:$0xff] %v1947
    %2012 = vst [vmem:[#allocation2 + $0xf0] sm:$0xff] %v1948
    %2013 = vst [vmem:[#allocation2 + $0xf8] sm:$0xff] %v1949
    %2014 = vst [vmem:[#allocation2 + $0x100] sm:$0xff] %v1950
    %2015 = vst [vmem:[#allocation2 + $0x108] sm:$0xff] %v1951
    %2016 = vst [vmem:[#allocation2 + $0x110] sm:$0xff] %v1952
    %2017 = vst [vmem:[#allocation2 + $0x118] sm:$0xff] %v1953
    %2018 = vst [vmem:[#allocation2 + $0x120] sm:$0xff] %v1954
    %2019 = vst [vmem:[#allocation2 + $0x128] sm:$0xff] %v1955
    %2020 = vst [vmem:[#allocation2 + $0x130] sm:$0xff] %v1956
    %2021 = vst [vmem:[#allocation2 + $0x138] sm:$0xff] %v1957
    %2022 = vst [vmem:[#allocation2 + $0x140] sm:$0xff] %v1958
    %2023 = vst [vmem:[#allocation2 + $0x148] sm:$0xff] %v1959
    %2024 = vst [vmem:[#allocation2 + $0x150] sm:$0xff] %v1960
    %2025 = vst [vmem:[#allocation2 + $0x158] sm:$0xff] %v1961
    %2026 = vst [vmem:[#allocation2 + $0x160] sm:$0xff] %v1962
    %2027 = vst [vmem:[#allocation2 + $0x168] sm:$0xff] %v1963
    %2028 = vst [vmem:[#allocation2 + $0x170] sm:$0xff] %v1964
    %2029 = vst [vmem:[#allocation2 + $0x178] sm:$0xff] %v1965
    %2030 = vst [vmem:[#allocation2 + $0x180] sm:$0xff] %v1966
    %2031 = vst [vmem:[#allocation2 + $0x188] sm:$0xff] %v1967
    %2032 = vst [vmem:[#allocation2 + $0x190] sm:$0xff] %v1968
    %2033 = vst [vmem:[#allocation2 + $0x198] sm:$0xff] %v1969
    %2034 = vst [vmem:[#allocation2 + $0x1a0] sm:$0xff] %v1970
    %2035 = vst [vmem:[#allocation2 + $0x1a8] sm:$0xff] %v1971
    %2036 = vst [vmem:[#allocation2 + $0x1b0] sm:$0xff] %v1972
    %2037 = vst [vmem:[#allocation2 + $0x1b8] sm:$0xff] %v1973
    %2038 = vst [vmem:[#allocation2 + $0x1c0] sm:$0xff] %v1974
    %2039 = vst [vmem:[#allocation2 + $0x1c8] sm:$0xff] %v1975
    %2040 = vst [vmem:[#allocation2 + $0x1d0] sm:$0xff] %v1976
    %2041 = vst [vmem:[#allocation2 + $0x1d8] sm:$0xff] %v1977
    %2042 = vst [vmem:[#allocation2 + $0x1e0] sm:$0xff] %v1978
    %2043 = vst [vmem:[#allocation2 + $0x1e8] sm:$0xff] %v1979
    %2044 = vst [vmem:[#allocation2 + $0x1f0] sm:$0xff] %v1980
    %2045 = vst [vmem:[#allocation2 + $0x1f8] sm:$0xff] %v1981
    // Predicated region
    $region30: #{tpu_custom_call.1} parent=1 // pred_check
      _
    $region31: #{tpu_custom_call.1} parent=1 // pred_check_branch
      %2047 = sbr.rel (0) target = $region33
    $region32: #{tpu_custom_call.1} parent=1 // pred_region
      %s2049 = ssub.s32 8192, 8192
      %2050 = vsyncadd [#allocation3], %s2049
      %s2051 = sshll.u32 [#allocation2], 4
      %s2052 = int_to_ptr.vmem [resolvable:$true] %s2051
      %2057 = dma.vmem_to_hbm [thread:$0]  %s2052, 8192, %s7, [#allocation3], 128, 128, 8
    $region33: #{tpu_custom_call.1} parent=1 // pred_fallthru
      _
    // Predicated region
    $region34: #{tpu_custom_call.1} parent=1 // pred_check
      _
    $region35: #{tpu_custom_call.1} parent=1 // pred_check_branch
      %2059 = sbr.rel (0) target = $region37
    $region36: #{tpu_custom_call.1} parent=1 // pred_region
      %2060 = dma.done [#allocation3], 8192
    $region37: #{tpu_custom_call.1} parent=1 // pred_fallthru
      _
    %2061 = vsyncpa [#allocation3], 1

</llo_original>
